<compile_context>
chip_gen: v7x
topology: tpu7x:2x2x1
jax: 0.10.0
libtpu: 0.0.40
codegen_flags: <defaults>
</compile_context>

<pallas_src>
import functools
import math

import jax
import jax.numpy as jnp
from jax import lax
from jax.experimental import pallas as pl
from jax.experimental.pallas import tpu as pltpu

LN_EPS = 1e-5


# --------------------------------------------------------------------------
# Relative-shift geometry (static Python ints)
# --------------------------------------------------------------------------
def _shift_geometry(tq, tkv):
    """E tensor geometry for the exact rel-shift.

    shifted[i, j] = flat([0 | pos])[tq + i*tkv + j]
                  = padded[i + r // (tkv+1), r % (tkv+1)],  r = (tq - i) + j
    E[i, r] = padded[(i + r // (tkv+1)) % tq, r % (tkv+1)]  (concat of row-rolls)
    shifted[i, j] = E[i, (tq - i) + j]                      (per-row left rotate)
    """
    n_blocks = (tq + tkv - 1) // (tkv + 1) + 1
    width0 = n_blocks * (tkv + 1)
    width = ((width0 + 127) // 128) * 128   # lane-pad so the strided rotate is lane-dense
    return n_blocks, width0, width


@functools.lru_cache(maxsize=None)
def _strided_roll_ok(rows, width):
    """One-time cached probe: does pltpu.roll's strided form compile on this backend
    and implement `row i -> jnp.roll(row, shift + i*stride)`?  If not (lowering
    error or semantic mismatch), the kernel falls back to the binary-decomposition
    shift, which is exact and already validated."""
    shift = width - rows

    def kern(x_ref, o_ref):
        o_ref[...] = pltpu.roll(x_ref[...], shift, 1, stride=1, stride_axis=0)

    try:
        x = jnp.arange(rows * width, dtype=jnp.float32).reshape(rows, width)
        got = pl.pallas_call(
            kern, out_shape=jax.ShapeDtypeStruct((rows, width), jnp.float32))(x)
        r = jnp.arange(rows)[:, None]
        c = jnp.arange(width)[None, :]
        want = x[r, (c - (shift + r)) % width]
        return bool(jnp.all(got == want))
    except Exception:   # noqa: BLE001 — any lowering/compile failure => fallback path
        return False


# --------------------------------------------------------------------------
# In-kernel exact Transformer-XL relative shift (operates on traced values)
# --------------------------------------------------------------------------
def _rel_shift_from_padded(padded, tq, tkv, *, use_strided_roll,
                           shift_masks=None, pad_block=None):
    n_blocks, width0, width = _shift_geometry(tq, tkv)
    blocks = [padded] + [jnp.roll(padded, -m, axis=0) for m in range(1, n_blocks)]
    e = blocks[0] if n_blocks == 1 else jnp.concatenate(blocks, axis=1)   # (tq, width0)

    if use_strided_roll:
        if pad_block is not None:
            # Padded lanes are never selected into [:, :tkv] after the rotate
            # (used offsets stay in [1, tq+tkv-1] < width0), any fill value works.
            e = jnp.concatenate([e, pad_block], axis=1)                   # (tq, width)
        # Row i: right-rotate by (width - tq) + i  ==  left-rotate by (tq - i).
        e = pltpu.roll(e, width - tq, 1, stride=1, stride_axis=0)
        return e[:, :tkv]

    # Fallback: per-row left rotate by (tq - i) via binary decomposition of static
    # rolls + precomputed row masks (hoisted out of the per-head loop).
    for k, bit in enumerate(shift_masks):
        e = jnp.where(bit, jnp.roll(e, -(1 << k), axis=1), e)
    return e[:, :tkv]


# --------------------------------------------------------------------------
# Fused kernel: LN + projections + rel-attention + softmax + output projection
# --------------------------------------------------------------------------
def _crossmodal_attention_kernel(xq_ref, xkv_ref, pt_ref, ln_ref, w_ref, b_ref,
                                 uv_ref, wo_ref, out_ref, *,
                                 num_heads, inv_sqrt_d, compute_dtype, exp_dtype,
                                 use_strided_roll):
    f32 = jnp.float32
    tq = xq_ref.shape[1]
    tkv = xkv_ref.shape[1]
    d_model = xq_ref.shape[2]
    d_head = d_model // num_heads

    gamma = ln_ref[0, :][None, :]
    beta = ln_ref[1, :][None, :]

    def layer_norm(x):                                    # f32 in / f32 out
        mu = jnp.mean(x, axis=-1, keepdims=True)
        var = jnp.mean((x - mu) ** 2, axis=-1, keepdims=True)
        return (x - mu) * lax.rsqrt(var + LN_EPS) * gamma + beta

    q_in = layer_norm(xq_ref[0].astype(f32)).astype(compute_dtype)      # (Tq, D)
    kv_in = layer_norm(xkv_ref[0].astype(f32)).astype(compute_dtype)    # (Tkv, D)

    # Full-width projections: one (T, D) @ (D, D) MXU matmul each, f32 accumulate.
    q_all = jnp.dot(q_in, w_ref[0], preferred_element_type=f32) + b_ref[0, :][None, :]
    k_all = jnp.dot(kv_in, w_ref[1], preferred_element_type=f32) + b_ref[1, :][None, :]
    v_all = jnp.dot(kv_in, w_ref[2], preferred_element_type=f32) + b_ref[2, :][None, :]

    # Relative-attention query biases (flat (D,) layout == per-head (H, Dh)).
    qu = (q_all + uv_ref[0, :][None, :]).astype(compute_dtype)          # (Tq, D)
    qv = (q_all + uv_ref[1, :][None, :]).astype(compute_dtype)          # (Tq, D)
    k_t = k_all.T.astype(compute_dtype)                                 # (D, Tkv) one transpose
    v_b = v_all.astype(compute_dtype)                                   # (Tkv, D)
    p_t = pt_ref[...]                                                   # (D, Tkv+1) precomputed

    # Hoisted, head-invariant rel-shift helpers (computed ONCE per block).
    _, width0, width = _shift_geometry(tq, tkv)
    shift_masks = None
    pad_block = None
    if use_strided_roll:
        if width > width0:
            pad_block = jnp.zeros((tq, width - width0), f32)
    else:
        row = lax.broadcasted_iota(jnp.int32, (tq, width0), 0)
        amt = tq - row                                    # per-row left rotate in [1, tq]
        shift_masks = tuple(((amt >> k) & 1) == 1
                            for k in range(max(1, int(tq).bit_length())))

    # TODO(synk): for very large Tq*Tkv switch this static unroll to a grid axis or
    # lax.fori_loop over heads to bound vreg live ranges (review item 11).
    out_acc = None
    for h in range(num_heads):
        cols = slice(h * d_head, (h + 1) * d_head)
        content = jnp.dot(qu[:, cols], k_t[cols, :],
                          preferred_element_type=f32)                   # (Tq, Tkv)
        pos_pad = jnp.dot(qv[:, cols], p_t[cols, :],
                          preferred_element_type=f32)                   # (Tq, Tkv+1)
        pos = _rel_shift_from_padded(pos_pad, tq, tkv,
                                     use_strided_roll=use_strided_roll,
                                     shift_masks=shift_masks,
                                     pad_block=pad_block)               # (Tq, Tkv)

        score = (content + pos) * inv_sqrt_d                            # f32
        score = score - jnp.max(score, axis=-1, keepdims=True)          # f32 max-sub
        exp_s = jnp.exp(score.astype(exp_dtype))                        # EUP (bf16 on v6e/v7x)
        denom = jnp.sum(exp_s.astype(f32), axis=-1, keepdims=True)      # f32 denominator
        inv_denom = pl.reciprocal(denom, approx=True)                   # EUP slot

        # PV with unnormalised weights; fold 1/denominator into the (Tq, Dh) context.
        ctx_h = jnp.dot(exp_s.astype(compute_dtype), v_b[:, cols],
                        preferred_element_type=f32) * inv_denom         # (Tq, Dh) f32

        # Output projection accumulated per head: lane-dense, no ctx scratch stores.
        contrib = jnp.dot(ctx_h.astype(compute_dtype),
                          wo_ref[pl.ds(h * d_head, d_head), :],
                          preferred_element_type=f32)                   # (Tq, D)
        out_acc = contrib if out_acc is None else out_acc + contrib

    out = out_acc + b_ref[3, :][None, :]
    out_ref[0, :, :] = out.astype(out_ref.dtype)


# --------------------------------------------------------------------------
# Plain-JAX glue / wrapper
# --------------------------------------------------------------------------
def _sinusoid_pos_encoding(length, d_model):
    position = jnp.arange(length, dtype=jnp.float32)[:, None]
    div_term = jnp.exp(jnp.arange(0, d_model, 2, dtype=jnp.float32)
                       * (-math.log(10000.0) / d_model))
    pe = jnp.zeros((length, d_model), jnp.float32)
    pe = pe.at[:, 0::2].set(jnp.sin(position * div_term))
    pe = pe.at[:, 1::2].set(jnp.cos(position * div_term))
    return pe


def _default_bf16_exp(compute_dtype):
    """bf16 softmax exp only for bf16 compute on v6e/v7x (bf16 EUP); f32 on v5e."""
    if jnp.dtype(compute_dtype) != jnp.dtype(jnp.bfloat16):
        return False
    try:
        kind = jax.devices()[0].device_kind.lower()
    except Exception:   # noqa: BLE001
        return False
    return ("v6" in kind) or ("v7" in kind)


def _vmem_limit_bytes(tq, tkv, d_model, compute_dtype):
    """Shape-aware scoped-VMEM request (review item: don't hard-code 32 MiB).

    Rough per-block estimate: resident weights + double-buffered I/O blocks +
    in-flight activations / score / shift temporaries, with 2x headroom,
    clamped to [32 MiB, 100 MiB].  (On v7x — 64 MiB physical — long sequences
    should instead go through the TODO'd Tq-tile grid axis.)
    """
    cb = jnp.dtype(compute_dtype).itemsize
    _, _, width = _shift_geometry(tq, tkv)
    weights = (4 * d_model * d_model + d_model * (tkv + 1)) * cb + 16 * d_model * 4
    io_blocks = (2 * tq * d_model + tkv * d_model) * 4
    working = (8 * tq * d_model + 2 * tkv * d_model
               + 6 * tq * max(width, tkv + 1)) * 4
    est = 2 * (weights + io_blocks) + working
    return int(min(100 * 1024 * 1024, max(32 * 1024 * 1024, 2 * est)))


def multiheaded_crossmodal_attention(params, inputs, img_feat, num_heads,
                                     compute_dtype=jnp.bfloat16,
                                     out_dtype=jnp.float32,
                                     bf16_softmax_exp=None,
                                     use_strided_roll=None):
    b, tq, d_model = inputs.shape
    b2, tkv, d2 = img_feat.shape
    assert b2 == b and d2 == d_model and d_model % num_heads == 0
    f32 = jnp.float32

    # (1) Batch-invariant positional keys, hoisted out of the kernel:
    #     p_t = Wp @ [0 | PE(Tkv)]^T  ->  (D, Tkv+1).  pos_proj has no bias, so the
    #     leading column is exactly zero, realising the rel-shift zero padding free.
    pe_pad = jnp.concatenate([jnp.zeros((1, d_model), f32),
                              _sinusoid_pos_encoding(tkv, d_model)], axis=0)
    p_t = jnp.dot(params["wp"].astype(f32), pe_pad.T).astype(compute_dtype)

    # torch Linear weights are (out, in): y = x @ W^T + b  ->  pre-transpose once.
    w_packed = jnp.stack([params["wq"].T, params["wk"].T,
                          params["wv"].T]).astype(compute_dtype)               # (3, D, D)
    wo_t = params["wo"].T.astype(compute_dtype)                                # (D, D)
    b_packed = jnp.stack([params["bq"], params["bk"],
                          params["bv"], params["bo"]]).astype(f32)             # (4, D)
    uv_packed = jnp.stack([params["u_bias"].reshape(-1),
                           params["v_bias"].reshape(-1)]).astype(f32)          # (2, D)
    ln_packed = jnp.stack([params["ln_gamma"], params["ln_beta"]]).astype(f32) # (2, D)

    if bf16_softmax_exp is None:
        bf16_softmax_exp = _default_bf16_exp(compute_dtype)
    exp_dtype = jnp.bfloat16 if bf16_softmax_exp else f32

    if use_strided_roll is None:
        _, _, width = _shift_geometry(tq, tkv)
        use_strided_roll = _strided_roll_ok(tq, width)

    kernel = functools.partial(
        _crossmodal_attention_kernel,
        num_heads=num_heads,
        inv_sqrt_d=1.0 / math.sqrt(d_model),
        compute_dtype=compute_dtype,
        exp_dtype=exp_dtype,
        use_strided_roll=use_strided_roll,
    )

    def bcast(shape):
        n = len(shape)
        return pl.BlockSpec(shape, lambda i, _n=n: (0,) * _n)

    # TODO(synk) (v7x): second "parallel" grid axis over Tq tiles (with a small halo
    # of padded positional-score rows for the shift) + pipeline_mode=pl.Buffered(1)
    # on the constant weight specs, to fit 64 MiB VMEM and feed both TensorCores.
    return pl.pallas_call(
        kernel,
        out_shape=jax.ShapeDtypeStruct((b, tq, d_model), out_dtype),
        grid=(b,),
        in_specs=[
            pl.BlockSpec((1, tq, d_model), lambda i: (i, 0, 0)),    # inputs (query)
            pl.BlockSpec((1, tkv, d_model), lambda i: (i, 0, 0)),   # img_feat (kv)
            bcast((d_model, tkv + 1)),                              # p_t = Wp @ PE_pad^T
            bcast((2, d_model)),                                    # LN gamma/beta
            bcast((3, d_model, d_model)),                           # Wq/Wk/Wv (pre-T)
            bcast((4, d_model)),                                    # bq/bk/bv/bo
            bcast((2, d_model)),                                    # u/v biases (flat)
            bcast((d_model, d_model)),                              # Wo (pre-T)
        ],
        out_specs=pl.BlockSpec((1, tq, d_model), lambda i: (i, 0, 0)),
        compiler_params=pltpu.CompilerParams(
            dimension_semantics=("parallel",),
            vmem_limit_bytes=_vmem_limit_bytes(tq, tkv, d_model, compute_dtype),
        ),
    )(inputs, img_feat, p_t, ln_packed, w_packed, b_packed, uv_packed, wo_t)


# --------------------------------------------------------------------------
# Parameter init + pure-JAX reference (mirrors the torch forward at eval time)
# --------------------------------------------------------------------------
def init_params(key, d_model, num_heads):
    d_head = d_model // num_heads

    def xavier(k, shape):
        fan_out, fan_in = shape
        bound = math.sqrt(6.0 / (fan_in + fan_out))
        return jax.random.uniform(k, shape, jnp.float32, -bound, bound)

    ks = jax.random.split(key, 7)
    return dict(
        ln_gamma=jnp.ones((d_model,), jnp.float32),
        ln_beta=jnp.zeros((d_model,), jnp.float32),
        wq=xavier(ks[0], (d_model, d_model)), bq=jnp.zeros((d_model,), jnp.float32),
        wk=xavier(ks[1], (d_model, d_model)), bk=jnp.zeros((d_model,), jnp.float32),
        wv=xavier(ks[2], (d_model, d_model)), bv=jnp.zeros((d_model,), jnp.float32),
        wp=xavier(ks[3], (d_model, d_model)),
        u_bias=xavier(ks[4], (num_heads, d_head)),
        v_bias=xavier(ks[5], (num_heads, d_head)),
        wo=xavier(ks[6], (d_model, d_model)), bo=jnp.zeros((d_model,), jnp.float32),
    )


def _relative_shift_ref(pos_score):
    b, h, t1, t2 = pos_score.shape
    zeros = jnp.zeros((b, h, t1, 1), pos_score.dtype)
    padded = jnp.concatenate([zeros, pos_score], axis=-1)
    padded = padded.reshape(b, h, t2 + 1, t1)
    return padded[:, :, 1:, :].reshape(b, h, t1, t2)


def reference_forward(params, inputs, img_feat, num_heads):
    b, tq, d = inputs.shape
    _, tkv, _ = img_feat.shape
    dh = d // num_heads
    pe = jnp.broadcast_to(_sinusoid_pos_encoding(tkv, d)[None], (b, tkv, d))

    def ln(x):
        mu = x.mean(-1, keepdims=True)
        var = ((x - mu) ** 2).mean(-1, keepdims=True)
        return (x - mu) / jnp.sqrt(var + LN_EPS) * params["ln_gamma"] + params["ln_beta"]

    q_in, kv_in = ln(inputs), ln(img_feat)
    q = (q_in @ params["wq"].T + params["bq"]).reshape(b, tq, num_heads, dh)
    k = (kv_in @ params["wk"].T + params["bk"]).reshape(b, tkv, num_heads, dh).transpose(0, 2, 1, 3)
    v = (kv_in @ params["wv"].T + params["bv"]).reshape(b, tkv, num_heads, dh).transpose(0, 2, 1, 3)
    p = (pe @ params["wp"].T).reshape(b, tkv, num_heads, dh)

    content = jnp.einsum('bqhe,bhke->bhqk', q + params["u_bias"], k)
    pos = jnp.einsum('bqhe,bkhe->bhqk', q + params["v_bias"], p)
    pos = _relative_shift_ref(pos)
    score = (content + pos) / math.sqrt(d)
    attn = jax.nn.softmax(score, -1)
    ctx = jnp.einsum('bhqk,bhke->bqhe', attn, v).reshape(b, tq, d)
    return ctx @ params["wo"].T + params["bo"]


if __name__ == "__main__":
    B, D_MODEL, NUM_HEADS = 2, 32, 4

    key = jax.random.PRNGKey(0)
    k_params, k_in, k_img, k_img2 = jax.random.split(key, 4)
    params = init_params(k_params, D_MODEL, NUM_HEADS)

    def check(tq, tkv, compute_dtype, tol, k_a, k_b, **kw):
        inputs = jax.random.normal(k_a, (B, tq, D_MODEL), jnp.float32)
        img_feat = jax.random.normal(k_b, (B, tkv, D_MODEL), jnp.float32)
        out = jax.block_until_ready(multiheaded_crossmodal_attention(
            params, inputs, img_feat, NUM_HEADS, compute_dtype=compute_dtype, **kw))
        with jax.default_matmul_precision("float32"):
            ref = jax.block_until_ready(
                reference_forward(params, inputs, img_feat, NUM_HEADS))
        assert out.shape == (B, tq, D_MODEL)
        out_f32 = out.astype(jnp.float32)
        assert bool(jnp.all(jnp.isfinite(out_f32)))
        err = float(jnp.max(jnp.abs(out_f32 - ref)))
        assert err < tol, (
            f"(tq={tq}, tkv={tkv}, dtype={compute_dtype.__name__}, kw={kw}) "
            f"max abs error too large: {err}")
        return err

    # f32 MXU operands; auto rel-shift path (strided XLU roll if the probe passes).
    check(8, 8, jnp.float32, 1e-2, k_in, k_img)
    # Non-square Tq != Tkv exercises the general relative shift.
    check(8, 16, jnp.float32, 1e-2, k_in, k_img2)
    # Explicit fallback (binary-decomposition) shift path stays correct.
    check(8, 16, jnp.float32, 1e-2, k_in, k_img2, use_strided_roll=False)
    # bf16 MXU operands + bf16 output (+ bf16 softmax exp on v6e/v7x); f32 accumulate.
    check(8, 8, jnp.bfloat16, 8e-2, k_in, k_img, out_dtype=jnp.bfloat16)

    print("KERNEL_OK")
</pallas_src>

<mosaic_0001>
module attributes {stable_mosaic.version = 11 : i64} {
  func.func @kern(%arg0: memref<8x128xf32, #tpu.memory_space<vmem>>, %arg1: memref<8x128xf32, #tpu.memory_space<vmem>>) attributes {dimension_semantics = [], scalar_prefetch = 0 : i64, scratch_operands = 0 : i64, tpu.core_type = #tpu.core_type<tc>} {
    %c0 = arith.constant 0 : index
    %c0_0 = arith.constant 0 : index
    %0 = vector.load %arg0[%c0, %c0_0] : memref<8x128xf32, #tpu.memory_space<vmem>>, vector<8x128xf32>
    %c120_i32 = arith.constant 120 : i32
    %1 = tpu.dynamic_rotate %0 by %c120_i32 dim 1 {stride = 1 : si32, stride_dimension = 0 : si32} : vector<8x128xf32>, i32 -> vector<8x128xf32>
    %c0_1 = arith.constant 0 : index
    %c0_2 = arith.constant 0 : index
    %2 = vector.load %arg1[%c0_1, %c0_2] : memref<8x128xf32, #tpu.memory_space<vmem>>, vector<8x128xf32>
    tpu.vector_store %arg1[%c0_1, %c0_2], %1 {strides = array<i32>} : memref<8x128xf32, #tpu.memory_space<vmem>>, vector<8x128xf32>,
    return
  }
}

module attributes {stable_mosaic.version = 11 : i64} {
  func.func @_crossmodal_attention_kernel(%arg0: i32, %arg1: memref<1x8x32xf32, #tpu.memory_space<vmem>>, %arg2: memref<1x8x32xf32, #tpu.memory_space<vmem>>, %arg3: memref<32x9xf32, #tpu.memory_space<vmem>>, %arg4: memref<2x32xf32, #tpu.memory_space<vmem>>, %arg5: memref<3x32x32xf32, #tpu.memory_space<vmem>>, %arg6: memref<4x32xf32, #tpu.memory_space<vmem>>, %arg7: memref<2x32xf32, #tpu.memory_space<vmem>>, %arg8: memref<32x32xf32, #tpu.memory_space<vmem>>, %arg9: memref<1x8x32xf32, #tpu.memory_space<vmem>>) attributes {dimension_semantics = [#tpu.dimension_semantics<parallel>], iteration_bounds = array<i64: 2>, scalar_prefetch = 0 : i64, scratch_operands = 0 : i64, tpu.core_type = #tpu.core_type<tc>, window_params = [{transform_indices = @transform_0, window_bounds = array<i64: 1, 8, 32>}, {transform_indices = @transform_1, window_bounds = array<i64: 1, 8, 32>}, {pipeline_mode = #tpu.pipeline_mode<synchronous>, transform_indices = @transform_2, window_bounds = array<i64: 32, 9>}, {pipeline_mode = #tpu.pipeline_mode<synchronous>, transform_indices = @transform_3, window_bounds = array<i64: 2, 32>}, {pipeline_mode = #tpu.pipeline_mode<synchronous>, transform_indices = @transform_4, window_bounds = array<i64: 3, 32, 32>}, {pipeline_mode = #tpu.pipeline_mode<synchronous>, transform_indices = @transform_5, window_bounds = array<i64: 4, 32>}, {pipeline_mode = #tpu.pipeline_mode<synchronous>, transform_indices = @transform_6, window_bounds = array<i64: 2, 32>}, {pipeline_mode = #tpu.pipeline_mode<synchronous>, transform_indices = @transform_7, window_bounds = array<i64: 32, 32>}, {transform_indices = @transform_8, window_bounds = array<i64: 1, 8, 32>}]} {
    %c0 = arith.constant 0 : index
    %c0_0 = arith.constant 0 : index
    %0 = vector.load %arg4[%c0, %c0_0] : memref<2x32xf32, #tpu.memory_space<vmem>>, vector<1x32xf32>
    %1 = vector.shape_cast %0 : vector<1x32xf32> to vector<32xf32>
    %2 = vector.shape_cast %1 : vector<32xf32> to vector<1x32xf32>
    %c1 = arith.constant 1 : index
    %c0_1 = arith.constant 0 : index
    %3 = vector.load %arg4[%c1, %c0_1] : memref<2x32xf32, #tpu.memory_space<vmem>>, vector<1x32xf32>
    %4 = vector.shape_cast %3 : vector<1x32xf32> to vector<32xf32>
    %5 = vector.shape_cast %4 : vector<32xf32> to vector<1x32xf32>
    %c0_2 = arith.constant 0 : index
    %c0_3 = arith.constant 0 : index
    %c0_4 = arith.constant 0 : index
    %6 = vector.load %arg1[%c0_2, %c0_3, %c0_4] : memref<1x8x32xf32, #tpu.memory_space<vmem>>, vector<1x8x32xf32>
    %7 = vector.shape_cast %6 : vector<1x8x32xf32> to vector<8x32xf32>
    %cst = arith.constant dense<0.000000e+00> : vector<8xf32>
    %8 = vector.multi_reduction <add>, %7, %cst [1] : vector<8x32xf32> to vector<8xf32>
    %9 = vector.shape_cast %8 : vector<8xf32> to vector<8x1xf32>
    %cst_5 = arith.constant 3.200000e+01 : f32
    %10 = vector.broadcast %cst_5 : f32 to vector<8x1xf32>
    %11 = arith.divf %9, %10 : vector<8x1xf32>
    %12 = vector.broadcast %11 : vector<8x1xf32> to vector<8x32xf32>
    %13 = arith.subf %7, %12 : vector<8x32xf32>
    %14 = arith.mulf %13, %13 : vector<8x32xf32>
    %cst_6 = arith.constant dense<0.000000e+00> : vector<8xf32>
    %15 = vector.multi_reduction <add>, %14, %cst_6 [1] : vector<8x32xf32> to vector<8xf32>
    %16 = vector.shape_cast %15 : vector<8xf32> to vector<8x1xf32>
    %cst_7 = arith.constant 3.200000e+01 : f32
    %17 = vector.broadcast %cst_7 : f32 to vector<8x1xf32>
    %18 = arith.divf %16, %17 : vector<8x1xf32>
    %19 = vector.broadcast %11 : vector<8x1xf32> to vector<8x32xf32>
    %20 = arith.subf %7, %19 : vector<8x32xf32>
    %cst_8 = arith.constant 9.99999974E-6 : f32
    %21 = vector.broadcast %cst_8 : f32 to vector<8x1xf32>
    %22 = arith.addf %18, %21 : vector<8x1xf32>
    %23 = math.rsqrt %22 : vector<8x1xf32>
    %24 = vector.broadcast %23 : vector<8x1xf32> to vector<8x32xf32>
    %25 = arith.mulf %20, %24 : vector<8x32xf32>
    %26 = vector.broadcast %2 : vector<1x32xf32> to vector<8x32xf32>
    %27 = arith.mulf %25, %26 : vector<8x32xf32>
    %28 = vector.broadcast %5 : vector<1x32xf32> to vector<8x32xf32>
    %29 = arith.addf %27, %28 : vector<8x32xf32>
    %c0_9 = arith.constant 0 : index
    %c0_10 = arith.constant 0 : index
    %c0_11 = arith.constant 0 : index
    %30 = vector.load %arg2[%c0_9, %c0_10, %c0_11] : memref<1x8x32xf32, #tpu.memory_space<vmem>>, vector<1x8x32xf32>
    %31 = vector.shape_cast %30 : vector<1x8x32xf32> to vector<8x32xf32>
    %cst_12 = arith.constant dense<0.000000e+00> : vector<8xf32>
    %32 = vector.multi_reduction <add>, %31, %cst_12 [1] : vector<8x32xf32> to vector<8xf32>
    %33 = vector.shape_cast %32 : vector<8xf32> to vector<8x1xf32>
    %cst_13 = arith.constant 3.200000e+01 : f32
    %34 = vector.broadcast %cst_13 : f32 to vector<8x1xf32>
    %35 = arith.divf %33, %34 : vector<8x1xf32>
    %36 = vector.broadcast %35 : vector<8x1xf32> to vector<8x32xf32>
    %37 = arith.subf %31, %36 : vector<8x32xf32>
    %38 = arith.mulf %37, %37 : vector<8x32xf32>
    %cst_14 = arith.constant dense<0.000000e+00> : vector<8xf32>
    %39 = vector.multi_reduction <add>, %38, %cst_14 [1] : vector<8x32xf32> to vector<8xf32>
    %40 = vector.shape_cast %39 : vector<8xf32> to vector<8x1xf32>
    %cst_15 = arith.constant 3.200000e+01 : f32
    %41 = vector.broadcast %cst_15 : f32 to vector<8x1xf32>
    %42 = arith.divf %40, %41 : vector<8x1xf32>
    %43 = vector.broadcast %35 : vector<8x1xf32> to vector<8x32xf32>
    %44 = arith.subf %31, %43 : vector<8x32xf32>
    %cst_16 = arith.constant 9.99999974E-6 : f32
    %45 = vector.broadcast %cst_16 : f32 to vector<8x1xf32>
    %46 = arith.addf %42, %45 : vector<8x1xf32>
    %47 = math.rsqrt %46 : vector<8x1xf32>
    %48 = vector.broadcast %47 : vector<8x1xf32> to vector<8x32xf32>
    %49 = arith.mulf %44, %48 : vector<8x32xf32>
    %50 = vector.broadcast %2 : vector<1x32xf32> to vector<8x32xf32>
    %51 = arith.mulf %49, %50 : vector<8x32xf32>
    %52 = vector.broadcast %5 : vector<1x32xf32> to vector<8x32xf32>
    %53 = arith.addf %51, %52 : vector<8x32xf32>
    %c0_17 = arith.constant 0 : index
    %c0_18 = arith.constant 0 : index
    %c0_19 = arith.constant 0 : index
    %54 = vector.load %arg5[%c0_17, %c0_18, %c0_19] : memref<3x32x32xf32, #tpu.memory_space<vmem>>, vector<1x32x32xf32>
    %55 = vector.shape_cast %54 : vector<1x32x32xf32> to vector<32x32xf32>
    %cst_20 = arith.constant dense<0.000000e+00> : vector<8x32xf32>
    %56 = tpu.matmul %29, %55, %cst_20 {dimension_numbers = #tpu.dot_dimension_numbers<[1], [0], [0], [1], [0, 0, 1, 1], [], []>} : vector<8x32xf32>, vector<32x32xf32>, vector<8x32xf32> -> vector<8x32xf32>
    %c0_21 = arith.constant 0 : index
    %c0_22 = arith.constant 0 : index
    %57 = vector.load %arg6[%c0_21, %c0_22] : memref<4x32xf32, #tpu.memory_space<vmem>>, vector<1x32xf32>
    %58 = vector.shape_cast %57 : vector<1x32xf32> to vector<32xf32>
    %59 = vector.shape_cast %58 : vector<32xf32> to vector<1x32xf32>
    %60 = vector.broadcast %59 : vector<1x32xf32> to vector<8x32xf32>
    %61 = arith.addf %56, %60 : vector<8x32xf32>
    %c1_23 = arith.constant 1 : index
    %c0_24 = arith.constant 0 : index
    %c0_25 = arith.constant 0 : index
    %62 = vector.load %arg5[%c1_23, %c0_24, %c0_25] : memref<3x32x32xf32, #tpu.memory_space<vmem>>, vector<1x32x32xf32>
    %63 = vector.shape_cast %62 : vector<1x32x32xf32> to vector<32x32xf32>
    %cst_26 = arith.constant dense<0.000000e+00> : vector<8x32xf32>
    %64 = tpu.matmul %53, %63, %cst_26 {dimension_numbers = #tpu.dot_dimension_numbers<[1], [0], [0], [1], [0, 0, 1, 1], [], []>} : vector<8x32xf32>, vector<32x32xf32>, vector<8x32xf32> -> vector<8x32xf32>
    %c1_27 = arith.constant 1 : index
    %c0_28 = arith.constant 0 : index
    %65 = vector.load %arg6[%c1_27, %c0_28] : memref<4x32xf32, #tpu.memory_space<vmem>>, vector<1x32xf32>
    %66 = vector.shape_cast %65 : vector<1x32xf32> to vector<32xf32>
    %67 = vector.shape_cast %66 : vector<32xf32> to vector<1x32xf32>
    %68 = vector.broadcast %67 : vector<1x32xf32> to vector<8x32xf32>
    %69 = arith.addf %64, %68 : vector<8x32xf32>
    %c2 = arith.constant 2 : index
    %c0_29 = arith.constant 0 : index
    %c0_30 = arith.constant 0 : index
    %70 = vector.load %arg5[%c2, %c0_29, %c0_30] : memref<3x32x32xf32, #tpu.memory_space<vmem>>, vector<1x32x32xf32>
    %71 = vector.shape_cast %70 : vector<1x32x32xf32> to vector<32x32xf32>
    %cst_31 = arith.constant dense<0.000000e+00> : vector<8x32xf32>
    %72 = tpu.matmul %53, %71, %cst_31 {dimension_numbers = #tpu.dot_dimension_numbers<[1], [0], [0], [1], [0, 0, 1, 1], [], []>} : vector<8x32xf32>, vector<32x32xf32>, vector<8x32xf32> -> vector<8x32xf32>
    %c2_32 = arith.constant 2 : index
    %c0_33 = arith.constant 0 : index
    %73 = vector.load %arg6[%c2_32, %c0_33] : memref<4x32xf32, #tpu.memory_space<vmem>>, vector<1x32xf32>
    %74 = vector.shape_cast %73 : vector<1x32xf32> to vector<32xf32>
    %75 = vector.shape_cast %74 : vector<32xf32> to vector<1x32xf32>
    %76 = vector.broadcast %75 : vector<1x32xf32> to vector<8x32xf32>
    %77 = arith.addf %72, %76 : vector<8x32xf32>
    %c0_34 = arith.constant 0 : index
    %c0_35 = arith.constant 0 : index
    %78 = vector.load %arg7[%c0_34, %c0_35] : memref<2x32xf32, #tpu.memory_space<vmem>>, vector<1x32xf32>
    %79 = vector.shape_cast %78 : vector<1x32xf32> to vector<32xf32>
    %80 = vector.shape_cast %79 : vector<32xf32> to vector<1x32xf32>
    %81 = vector.broadcast %80 : vector<1x32xf32> to vector<8x32xf32>
    %82 = arith.addf %61, %81 : vector<8x32xf32>
    %c1_36 = arith.constant 1 : index
    %c0_37 = arith.constant 0 : index
    %83 = vector.load %arg7[%c1_36, %c0_37] : memref<2x32xf32, #tpu.memory_space<vmem>>, vector<1x32xf32>
    %84 = vector.shape_cast %83 : vector<1x32xf32> to vector<32xf32>
    %85 = vector.shape_cast %84 : vector<32xf32> to vector<1x32xf32>
    %86 = vector.broadcast %85 : vector<1x32xf32> to vector<8x32xf32>
    %87 = arith.addf %61, %86 : vector<8x32xf32>
    %88 = tpu.transpose %69, [1, 0] : vector<8x32xf32> -> vector<32x8xf32>
    %c0_38 = arith.constant 0 : index
    %c0_39 = arith.constant 0 : index
    %89 = vector.load %arg3[%c0_38, %c0_39] : memref<32x9xf32, #tpu.memory_space<vmem>>, vector<32x9xf32>
    %90 = tpu.iota {dimensions = array<i32: 0>} : vector<8x18xi32>
    %c8_i32 = arith.constant 8 : i32
    %91 = vector.broadcast %c8_i32 : i32 to vector<8x18xi32>
    %92 = arith.subi %91, %90 : vector<8x18xi32>
    %c0_i32 = arith.constant 0 : i32
    %93 = vector.broadcast %c0_i32 : i32 to vector<8x18xi32>
    %94 = arith.shrsi %92, %93 : vector<8x18xi32>
    %c1_i32 = arith.constant 1 : i32
    %95 = vector.broadcast %c1_i32 : i32 to vector<8x18xi32>
    %96 = arith.andi %94, %95 : vector<8x18xi32>
    %c1_i32_40 = arith.constant 1 : i32
    %97 = vector.broadcast %c1_i32_40 : i32 to vector<8x18xi32>
    %98 = arith.cmpi eq, %96, %97 : vector<8x18xi32>
    %c1_i32_41 = arith.constant 1 : i32
    %99 = vector.broadcast %c1_i32_41 : i32 to vector<8x18xi32>
    %100 = arith.shrsi %92, %99 : vector<8x18xi32>
    %c1_i32_42 = arith.constant 1 : i32
    %101 = vector.broadcast %c1_i32_42 : i32 to vector<8x18xi32>
    %102 = arith.andi %100, %101 : vector<8x18xi32>
    %c1_i32_43 = arith.constant 1 : i32
    %103 = vector.broadcast %c1_i32_43 : i32 to vector<8x18xi32>
    %104 = arith.cmpi eq, %102, %103 : vector<8x18xi32>
    %c2_i32 = arith.constant 2 : i32
    %105 = vector.broadcast %c2_i32 : i32 to vector<8x18xi32>
    %106 = arith.shrsi %92, %105 : vector<8x18xi32>
    %c1_i32_44 = arith.constant 1 : i32
    %107 = vector.broadcast %c1_i32_44 : i32 to vector<8x18xi32>
    %108 = arith.andi %106, %107 : vector<8x18xi32>
    %c1_i32_45 = arith.constant 1 : i32
    %109 = vector.broadcast %c1_i32_45 : i32 to vector<8x18xi32>
    %110 = arith.cmpi eq, %108, %109 : vector<8x18xi32>
    %c3_i32 = arith.constant 3 : i32
    %111 = vector.broadcast %c3_i32 : i32 to vector<8x18xi32>
    %112 = arith.shrsi %92, %111 : vector<8x18xi32>
    %c1_i32_46 = arith.constant 1 : i32
    %113 = vector.broadcast %c1_i32_46 : i32 to vector<8x18xi32>
    %114 = arith.andi %112, %113 : vector<8x18xi32>
    %c1_i32_47 = arith.constant 1 : i32
    %115 = vector.broadcast %c1_i32_47 : i32 to vector<8x18xi32>
    %116 = arith.cmpi eq, %114, %115 : vector<8x18xi32>
    %117 = vector.extract_strided_slice %82 {offsets = [0, 0], sizes = [8, 8], strides = [1, 1]} : vector<8x32xf32> to vector<8x8xf32>
    %118 = vector.extract_strided_slice %88 {offsets = [0, 0], sizes = [8, 8], strides = [1, 1]} : vector<32x8xf32> to vector<8x8xf32>
    %cst_48 = arith.constant dense<0.000000e+00> : vector<8x8xf32>
    %119 = tpu.matmul %117, %118, %cst_48 {dimension_numbers = #tpu.dot_dimension_numbers<[1], [0], [0], [1], [0, 0, 1, 1], [], []>} : vector<8x8xf32>, vector<8x8xf32>, vector<8x8xf32> -> vector<8x8xf32>
    %120 = vector.extract_strided_slice %87 {offsets = [0, 0], sizes = [8, 8], strides = [1, 1]} : vector<8x32xf32> to vector<8x8xf32>
    %121 = vector.extract_strided_slice %89 {offsets = [0, 0], sizes = [8, 9], strides = [1, 1]} : vector<32x9xf32> to vector<8x9xf32>
    %cst_49 = arith.constant dense<0.000000e+00> : vector<8x9xf32>
    %122 = tpu.matmul %120, %121, %cst_49 {dimension_numbers = #tpu.dot_dimension_numbers<[1], [0], [0], [1], [0, 0, 1, 1], [], []>} : vector<8x8xf32>, vector<8x9xf32>, vector<8x9xf32> -> vector<8x9xf32>
    %123 = vector.extract_strided_slice %122 {offsets = [1, 0], sizes = [7, 9], strides = [1, 1]} : vector<8x9xf32> to vector<7x9xf32>
    %124 = vector.extract_strided_slice %122 {offsets = [0, 0], sizes = [1, 9], strides = [1, 1]} : vector<8x9xf32> to vector<1x9xf32>
    %125 = tpu.concatenate %123, %124 in 0 : vector<7x9xf32>, vector<1x9xf32> -> vector<8x9xf32>
    %126 = tpu.concatenate %122, %125 in 1 : vector<8x9xf32>, vector<8x9xf32> -> vector<8x18xf32>
    %127 = vector.extract_strided_slice %126 {offsets = [0, 1], sizes = [8, 17], strides = [1, 1]} : vector<8x18xf32> to vector<8x17xf32>
    %128 = vector.extract_strided_slice %126 {offsets = [0, 0], sizes = [8, 1], strides = [1, 1]} : vector<8x18xf32> to vector<8x1xf32>
    %129 = tpu.concatenate %127, %128 in 1 : vector<8x17xf32>, vector<8x1xf32> -> vector<8x18xf32>
    %130 = arith.select %98, %129, %126 : vector<8x18xi1>, vector<8x18xf32>
    %131 = vector.extract_strided_slice %130 {offsets = [0, 2], sizes = [8, 16], strides = [1, 1]} : vector<8x18xf32> to vector<8x16xf32>
    %132 = vector.extract_strided_slice %130 {offsets = [0, 0], sizes = [8, 2], strides = [1, 1]} : vector<8x18xf32> to vector<8x2xf32>
    %133 = tpu.concatenate %131, %132 in 1 : vector<8x16xf32>, vector<8x2xf32> -> vector<8x18xf32>
    %134 = arith.select %104, %133, %130 : vector<8x18xi1>, vector<8x18xf32>
    %135 = vector.extract_strided_slice %134 {offsets = [0, 4], sizes = [8, 14], strides = [1, 1]} : vector<8x18xf32> to vector<8x14xf32>
    %136 = vector.extract_strided_slice %134 {offsets = [0, 0], sizes = [8, 4], strides = [1, 1]} : vector<8x18xf32> to vector<8x4xf32>
    %137 = tpu.concatenate %135, %136 in 1 : vector<8x14xf32>, vector<8x4xf32> -> vector<8x18xf32>
    %138 = arith.select %110, %137, %134 : vector<8x18xi1>, vector<8x18xf32>
    %139 = vector.extract_strided_slice %138 {offsets = [0, 8], sizes = [8, 10], strides = [1, 1]} : vector<8x18xf32> to vector<8x10xf32>
    %140 = vector.extract_strided_slice %138 {offsets = [0, 0], sizes = [8, 8], strides = [1, 1]} : vector<8x18xf32> to vector<8x8xf32>
    %141 = tpu.concatenate %139, %140 in 1 : vector<8x10xf32>, vector<8x8xf32> -> vector<8x18xf32>
    %142 = arith.select %116, %141, %138 : vector<8x18xi1>, vector<8x18xf32>
    %143 = vector.extract_strided_slice %142 {offsets = [0, 0], sizes = [8, 8], strides = [1, 1]} : vector<8x18xf32> to vector<8x8xf32>
    %144 = arith.addf %119, %143 : vector<8x8xf32>
    %cst_50 = arith.constant 0.176776692 : f32
    %145 = vector.broadcast %cst_50 : f32 to vector<8x8xf32>
    %146 = arith.mulf %144, %145 : vector<8x8xf32>
    %cst_51 = arith.constant dense<0xFF800000> : vector<8xf32>
    %147 = vector.multi_reduction <maximumf>, %146, %cst_51 [1] : vector<8x8xf32> to vector<8xf32>
    %148 = vector.shape_cast %147 : vector<8xf32> to vector<8x1xf32>
    %149 = vector.broadcast %148 : vector<8x1xf32> to vector<8x8xf32>
    %150 = arith.subf %146, %149 : vector<8x8xf32>
    %151 = math.exp %150 : vector<8x8xf32>
    %cst_52 = arith.constant dense<0.000000e+00> : vector<8xf32>
    %152 = vector.multi_reduction <add>, %151, %cst_52 [1] : vector<8x8xf32> to vector<8xf32>
    %153 = vector.shape_cast %152 : vector<8xf32> to vector<8x1xf32>
    %154 = tpu.reciprocal %153 {approx = true} : vector<8x1xf32> -> vector<8x1xf32>
    %155 = vector.extract_strided_slice %77 {offsets = [0, 0], sizes = [8, 8], strides = [1, 1]} : vector<8x32xf32> to vector<8x8xf32>
    %cst_53 = arith.constant dense<0.000000e+00> : vector<8x8xf32>
    %156 = tpu.matmul %151, %155, %cst_53 {dimension_numbers = #tpu.dot_dimension_numbers<[1], [0], [0], [1], [0, 0, 1, 1], [], []>} : vector<8x8xf32>, vector<8x8xf32>, vector<8x8xf32> -> vector<8x8xf32>
    %157 = vector.broadcast %154 : vector<8x1xf32> to vector<8x8xf32>
    %158 = arith.mulf %156, %157 : vector<8x8xf32>
    %c0_54 = arith.constant 0 : index
    %c0_55 = arith.constant 0 : index
    %159 = vector.load %arg8[%c0_54, %c0_55] : memref<32x32xf32, #tpu.memory_space<vmem>>, vector<8x32xf32>
    %cst_56 = arith.constant dense<0.000000e+00> : vector<8x32xf32>
    %160 = tpu.matmul %158, %159, %cst_56 {dimension_numbers = #tpu.dot_dimension_numbers<[1], [0], [0], [1], [0, 0, 1, 1], [], []>} : vector<8x8xf32>, vector<8x32xf32>, vector<8x32xf32> -> vector<8x32xf32>
    %161 = vector.extract_strided_slice %82 {offsets = [0, 8], sizes = [8, 8], strides = [1, 1]} : vector<8x32xf32> to vector<8x8xf32>
    %162 = vector.extract_strided_slice %88 {offsets = [8, 0], sizes = [8, 8], strides = [1, 1]} : vector<32x8xf32> to vector<8x8xf32>
    %cst_57 = arith.constant dense<0.000000e+00> : vector<8x8xf32>
    %163 = tpu.matmul %161, %162, %cst_57 {dimension_numbers = #tpu.dot_dimension_numbers<[1], [0], [0], [1], [0, 0, 1, 1], [], []>} : vector<8x8xf32>, vector<8x8xf32>, vector<8x8xf32> -> vector<8x8xf32>
    %164 = vector.extract_strided_slice %87 {offsets = [0, 8], sizes = [8, 8], strides = [1, 1]} : vector<8x32xf32> to vector<8x8xf32>
    %165 = vector.extract_strided_slice %89 {offsets = [8, 0], sizes = [8, 9], strides = [1, 1]} : vector<32x9xf32> to vector<8x9xf32>
    %cst_58 = arith.constant dense<0.000000e+00> : vector<8x9xf32>
    %166 = tpu.matmul %164, %165, %cst_58 {dimension_numbers = #tpu.dot_dimension_numbers<[1], [0], [0], [1], [0, 0, 1, 1], [], []>} : vector<8x8xf32>, vector<8x9xf32>, vector<8x9xf32> -> vector<8x9xf32>
    %167 = vector.extract_strided_slice %166 {offsets = [1, 0], sizes = [7, 9], strides = [1, 1]} : vector<8x9xf32> to vector<7x9xf32>
    %168 = vector.extract_strided_slice %166 {offsets = [0, 0], sizes = [1, 9], strides = [1, 1]} : vector<8x9xf32> to vector<1x9xf32>
    %169 = tpu.concatenate %167, %168 in 0 : vector<7x9xf32>, vector<1x9xf32> -> vector<8x9xf32>
    %170 = tpu.concatenate %166, %169 in 1 : vector<8x9xf32>, vector<8x9xf32> -> vector<8x18xf32>
    %171 = vector.extract_strided_slice %170 {offsets = [0, 1], sizes = [8, 17], strides = [1, 1]} : vector<8x18xf32> to vector<8x17xf32>
    %172 = vector.extract_strided_slice %170 {offsets = [0, 0], sizes = [8, 1], strides = [1, 1]} : vector<8x18xf32> to vector<8x1xf32>
    %173 = tpu.concatenate %171, %172 in 1 : vector<8x17xf32>, vector<8x1xf32> -> vector<8x18xf32>
    %174 = arith.select %98, %173, %170 : vector<8x18xi1>, vector<8x18xf32>
    %175 = vector.extract_strided_slice %174 {offsets = [0, 2], sizes = [8, 16], strides = [1, 1]} : vector<8x18xf32> to vector<8x16xf32>
    %176 = vector.extract_strided_slice %174 {offsets = [0, 0], sizes = [8, 2], strides = [1, 1]} : vector<8x18xf32> to vector<8x2xf32>
    %177 = tpu.concatenate %175, %176 in 1 : vector<8x16xf32>, vector<8x2xf32> -> vector<8x18xf32>
    %178 = arith.select %104, %177, %174 : vector<8x18xi1>, vector<8x18xf32>
    %179 = vector.extract_strided_slice %178 {offsets = [0, 4], sizes = [8, 14], strides = [1, 1]} : vector<8x18xf32> to vector<8x14xf32>
    %180 = vector.extract_strided_slice %178 {offsets = [0, 0], sizes = [8, 4], strides = [1, 1]} : vector<8x18xf32> to vector<8x4xf32>
    %181 = tpu.concatenate %179, %180 in 1 : vector<8x14xf32>, vector<8x4xf32> -> vector<8x18xf32>
    %182 = arith.select %110, %181, %178 : vector<8x18xi1>, vector<8x18xf32>
    %183 = vector.extract_strided_slice %182 {offsets = [0, 8], sizes = [8, 10], strides = [1, 1]} : vector<8x18xf32> to vector<8x10xf32>
    %184 = vector.extract_strided_slice %182 {offsets = [0, 0], sizes = [8, 8], strides = [1, 1]} : vector<8x18xf32> to vector<8x8xf32>
    %185 = tpu.concatenate %183, %184 in 1 : vector<8x10xf32>, vector<8x8xf32> -> vector<8x18xf32>
    %186 = arith.select %116, %185, %182 : vector<8x18xi1>, vector<8x18xf32>
    %187 = vector.extract_strided_slice %186 {offsets = [0, 0], sizes = [8, 8], strides = [1, 1]} : vector<8x18xf32> to vector<8x8xf32>
    %188 = arith.addf %163, %187 : vector<8x8xf32>
    %cst_59 = arith.constant 0.176776692 : f32
    %189 = vector.broadcast %cst_59 : f32 to vector<8x8xf32>
    %190 = arith.mulf %188, %189 : vector<8x8xf32>
    %cst_60 = arith.constant dense<0xFF800000> : vector<8xf32>
    %191 = vector.multi_reduction <maximumf>, %190, %cst_60 [1] : vector<8x8xf32> to vector<8xf32>
    %192 = vector.shape_cast %191 : vector<8xf32> to vector<8x1xf32>
    %193 = vector.broadcast %192 : vector<8x1xf32> to vector<8x8xf32>
    %194 = arith.subf %190, %193 : vector<8x8xf32>
    %195 = math.exp %194 : vector<8x8xf32>
    %cst_61 = arith.constant dense<0.000000e+00> : vector<8xf32>
    %196 = vector.multi_reduction <add>, %195, %cst_61 [1] : vector<8x8xf32> to vector<8xf32>
    %197 = vector.shape_cast %196 : vector<8xf32> to vector<8x1xf32>
    %198 = tpu.reciprocal %197 {approx = true} : vector<8x1xf32> -> vector<8x1xf32>
    %199 = vector.extract_strided_slice %77 {offsets = [0, 8], sizes = [8, 8], strides = [1, 1]} : vector<8x32xf32> to vector<8x8xf32>
    %cst_62 = arith.constant dense<0.000000e+00> : vector<8x8xf32>
    %200 = tpu.matmul %195, %199, %cst_62 {dimension_numbers = #tpu.dot_dimension_numbers<[1], [0], [0], [1], [0, 0, 1, 1], [], []>} : vector<8x8xf32>, vector<8x8xf32>, vector<8x8xf32> -> vector<8x8xf32>
    %201 = vector.broadcast %198 : vector<8x1xf32> to vector<8x8xf32>
    %202 = arith.mulf %200, %201 : vector<8x8xf32>
    %c8 = arith.constant 8 : index
    %c0_63 = arith.constant 0 : index
    %203 = vector.load %arg8[%c8, %c0_63] : memref<32x32xf32, #tpu.memory_space<vmem>>, vector<8x32xf32>
    %cst_64 = arith.constant dense<0.000000e+00> : vector<8x32xf32>
    %204 = tpu.matmul %202, %203, %cst_64 {dimension_numbers = #tpu.dot_dimension_numbers<[1], [0], [0], [1], [0, 0, 1, 1], [], []>} : vector<8x8xf32>, vector<8x32xf32>, vector<8x32xf32> -> vector<8x32xf32>
    %205 = arith.addf %160, %204 : vector<8x32xf32>
    %206 = vector.extract_strided_slice %82 {offsets = [0, 16], sizes = [8, 8], strides = [1, 1]} : vector<8x32xf32> to vector<8x8xf32>
    %207 = vector.extract_strided_slice %88 {offsets = [16, 0], sizes = [8, 8], strides = [1, 1]} : vector<32x8xf32> to vector<8x8xf32>
    %cst_65 = arith.constant dense<0.000000e+00> : vector<8x8xf32>
    %208 = tpu.matmul %206, %207, %cst_65 {dimension_numbers = #tpu.dot_dimension_numbers<[1], [0], [0], [1], [0, 0, 1, 1], [], []>} : vector<8x8xf32>, vector<8x8xf32>, vector<8x8xf32> -> vector<8x8xf32>
    %209 = vector.extract_strided_slice %87 {offsets = [0, 16], sizes = [8, 8], strides = [1, 1]} : vector<8x32xf32> to vector<8x8xf32>
    %210 = vector.extract_strided_slice %89 {offsets = [16, 0], sizes = [8, 9], strides = [1, 1]} : vector<32x9xf32> to vector<8x9xf32>
    %cst_66 = arith.constant dense<0.000000e+00> : vector<8x9xf32>
    %211 = tpu.matmul %209, %210, %cst_66 {dimension_numbers = #tpu.dot_dimension_numbers<[1], [0], [0], [1], [0, 0, 1, 1], [], []>} : vector<8x8xf32>, vector<8x9xf32>, vector<8x9xf32> -> vector<8x9xf32>
    %212 = vector.extract_strided_slice %211 {offsets = [1, 0], sizes = [7, 9], strides = [1, 1]} : vector<8x9xf32> to vector<7x9xf32>
    %213 = vector.extract_strided_slice %211 {offsets = [0, 0], sizes = [1, 9], strides = [1, 1]} : vector<8x9xf32> to vector<1x9xf32>
    %214 = tpu.concatenate %212, %213 in 0 : vector<7x9xf32>, vector<1x9xf32> -> vector<8x9xf32>
    %215 = tpu.concatenate %211, %214 in 1 : vector<8x9xf32>, vector<8x9xf32> -> vector<8x18xf32>
    %216 = vector.extract_strided_slice %215 {offsets = [0, 1], sizes = [8, 17], strides = [1, 1]} : vector<8x18xf32> to vector<8x17xf32>
    %217 = vector.extract_strided_slice %215 {offsets = [0, 0], sizes = [8, 1], strides = [1, 1]} : vector<8x18xf32> to vector<8x1xf32>
    %218 = tpu.concatenate %216, %217 in 1 : vector<8x17xf32>, vector<8x1xf32> -> vector<8x18xf32>
    %219 = arith.select %98, %218, %215 : vector<8x18xi1>, vector<8x18xf32>
    %220 = vector.extract_strided_slice %219 {offsets = [0, 2], sizes = [8, 16], strides = [1, 1]} : vector<8x18xf32> to vector<8x16xf32>
    %221 = vector.extract_strided_slice %219 {offsets = [0, 0], sizes = [8, 2], strides = [1, 1]} : vector<8x18xf32> to vector<8x2xf32>
    %222 = tpu.concatenate %220, %221 in 1 : vector<8x16xf32>, vector<8x2xf32> -> vector<8x18xf32>
    %223 = arith.select %104, %222, %219 : vector<8x18xi1>, vector<8x18xf32>
    %224 = vector.extract_strided_slice %223 {offsets = [0, 4], sizes = [8, 14], strides = [1, 1]} : vector<8x18xf32> to vector<8x14xf32>
    %225 = vector.extract_strided_slice %223 {offsets = [0, 0], sizes = [8, 4], strides = [1, 1]} : vector<8x18xf32> to vector<8x4xf32>
    %226 = tpu.concatenate %224, %225 in 1 : vector<8x14xf32>, vector<8x4xf32> -> vector<8x18xf32>
    %227 = arith.select %110, %226, %223 : vector<8x18xi1>, vector<8x18xf32>
    %228 = vector.extract_strided_slice %227 {offsets = [0, 8], sizes = [8, 10], strides = [1, 1]} : vector<8x18xf32> to vector<8x10xf32>
    %229 = vector.extract_strided_slice %227 {offsets = [0, 0], sizes = [8, 8], strides = [1, 1]} : vector<8x18xf32> to vector<8x8xf32>
    %230 = tpu.concatenate %228, %229 in 1 : vector<8x10xf32>, vector<8x8xf32> -> vector<8x18xf32>
    %231 = arith.select %116, %230, %227 : vector<8x18xi1>, vector<8x18xf32>
    %232 = vector.extract_strided_slice %231 {offsets = [0, 0], sizes = [8, 8], strides = [1, 1]} : vector<8x18xf32> to vector<8x8xf32>
    %233 = arith.addf %208, %232 : vector<8x8xf32>
    %cst_67 = arith.constant 0.176776692 : f32
    %234 = vector.broadcast %cst_67 : f32 to vector<8x8xf32>
    %235 = arith.mulf %233, %234 : vector<8x8xf32>
    %cst_68 = arith.constant dense<0xFF800000> : vector<8xf32>
    %236 = vector.multi_reduction <maximumf>, %235, %cst_68 [1] : vector<8x8xf32> to vector<8xf32>
    %237 = vector.shape_cast %236 : vector<8xf32> to vector<8x1xf32>
    %238 = vector.broadcast %237 : vector<8x1xf32> to vector<8x8xf32>
    %239 = arith.subf %235, %238 : vector<8x8xf32>
    %240 = math.exp %239 : vector<8x8xf32>
    %cst_69 = arith.constant dense<0.000000e+00> : vector<8xf32>
    %241 = vector.multi_reduction <add>, %240, %cst_69 [1] : vector<8x8xf32> to vector<8xf32>
    %242 = vector.shape_cast %241 : vector<8xf32> to vector<8x1xf32>
    %243 = tpu.reciprocal %242 {approx = true} : vector<8x1xf32> -> vector<8x1xf32>
    %244 = vector.extract_strided_slice %77 {offsets = [0, 16], sizes = [8, 8], strides = [1, 1]} : vector<8x32xf32> to vector<8x8xf32>
    %cst_70 = arith.constant dense<0.000000e+00> : vector<8x8xf32>
    %245 = tpu.matmul %240, %244, %cst_70 {dimension_numbers = #tpu.dot_dimension_numbers<[1], [0], [0], [1], [0, 0, 1, 1], [], []>} : vector<8x8xf32>, vector<8x8xf32>, vector<8x8xf32> -> vector<8x8xf32>
    %246 = vector.broadcast %243 : vector<8x1xf32> to vector<8x8xf32>
    %247 = arith.mulf %245, %246 : vector<8x8xf32>
    %c16 = arith.constant 16 : index
    %c0_71 = arith.constant 0 : index
    %248 = vector.load %arg8[%c16, %c0_71] : memref<32x32xf32, #tpu.memory_space<vmem>>, vector<8x32xf32>
    %cst_72 = arith.constant dense<0.000000e+00> : vector<8x32xf32>
    %249 = tpu.matmul %247, %248, %cst_72 {dimension_numbers = #tpu.dot_dimension_numbers<[1], [0], [0], [1], [0, 0, 1, 1], [], []>} : vector<8x8xf32>, vector<8x32xf32>, vector<8x32xf32> -> vector<8x32xf32>
    %250 = arith.addf %205, %249 : vector<8x32xf32>
    %251 = vector.extract_strided_slice %82 {offsets = [0, 24], sizes = [8, 8], strides = [1, 1]} : vector<8x32xf32> to vector<8x8xf32>
    %252 = vector.extract_strided_slice %88 {offsets = [24, 0], sizes = [8, 8], strides = [1, 1]} : vector<32x8xf32> to vector<8x8xf32>
    %cst_73 = arith.constant dense<0.000000e+00> : vector<8x8xf32>
    %253 = tpu.matmul %251, %252, %cst_73 {dimension_numbers = #tpu.dot_dimension_numbers<[1], [0], [0], [1], [0, 0, 1, 1], [], []>} : vector<8x8xf32>, vector<8x8xf32>, vector<8x8xf32> -> vector<8x8xf32>
    %254 = vector.extract_strided_slice %87 {offsets = [0, 24], sizes = [8, 8], strides = [1, 1]} : vector<8x32xf32> to vector<8x8xf32>
    %255 = vector.extract_strided_slice %89 {offsets = [24, 0], sizes = [8, 9], strides = [1, 1]} : vector<32x9xf32> to vector<8x9xf32>
    %cst_74 = arith.constant dense<0.000000e+00> : vector<8x9xf32>
    %256 = tpu.matmul %254, %255, %cst_74 {dimension_numbers = #tpu.dot_dimension_numbers<[1], [0], [0], [1], [0, 0, 1, 1], [], []>} : vector<8x8xf32>, vector<8x9xf32>, vector<8x9xf32> -> vector<8x9xf32>
    %257 = vector.extract_strided_slice %256 {offsets = [1, 0], sizes = [7, 9], strides = [1, 1]} : vector<8x9xf32> to vector<7x9xf32>
    %258 = vector.extract_strided_slice %256 {offsets = [0, 0], sizes = [1, 9], strides = [1, 1]} : vector<8x9xf32> to vector<1x9xf32>
    %259 = tpu.concatenate %257, %258 in 0 : vector<7x9xf32>, vector<1x9xf32> -> vector<8x9xf32>
    %260 = tpu.concatenate %256, %259 in 1 : vector<8x9xf32>, vector<8x9xf32> -> vector<8x18xf32>
    %261 = vector.extract_strided_slice %260 {offsets = [0, 1], sizes = [8, 17], strides = [1, 1]} : vector<8x18xf32> to vector<8x17xf32>
    %262 = vector.extract_strided_slice %260 {offsets = [0, 0], sizes = [8, 1], strides = [1, 1]} : vector<8x18xf32> to vector<8x1xf32>
    %263 = tpu.concatenate %261, %262 in 1 : vector<8x17xf32>, vector<8x1xf32> -> vector<8x18xf32>
    %264 = arith.select %98, %263, %260 : vector<8x18xi1>, vector<8x18xf32>
    %265 = vector.extract_strided_slice %264 {offsets = [0, 2], sizes = [8, 16], strides = [1, 1]} : vector<8x18xf32> to vector<8x16xf32>
    %266 = vector.extract_strided_slice %264 {offsets = [0, 0], sizes = [8, 2], strides = [1, 1]} : vector<8x18xf32> to vector<8x2xf32>
    %267 = tpu.concatenate %265, %266 in 1 : vector<8x16xf32>, vector<8x2xf32> -> vector<8x18xf32>
    %268 = arith.select %104, %267, %264 : vector<8x18xi1>, vector<8x18xf32>
    %269 = vector.extract_strided_slice %268 {offsets = [0, 4], sizes = [8, 14], strides = [1, 1]} : vector<8x18xf32> to vector<8x14xf32>
    %270 = vector.extract_strided_slice %268 {offsets = [0, 0], sizes = [8, 4], strides = [1, 1]} : vector<8x18xf32> to vector<8x4xf32>
    %271 = tpu.concatenate %269, %270 in 1 : vector<8x14xf32>, vector<8x4xf32> -> vector<8x18xf32>
    %272 = arith.select %110, %271, %268 : vector<8x18xi1>, vector<8x18xf32>
    %273 = vector.extract_strided_slice %272 {offsets = [0, 8], sizes = [8, 10], strides = [1, 1]} : vector<8x18xf32> to vector<8x10xf32>
    %274 = vector.extract_strided_slice %272 {offsets = [0, 0], sizes = [8, 8], strides = [1, 1]} : vector<8x18xf32> to vector<8x8xf32>
    %275 = tpu.concatenate %273, %274 in 1 : vector<8x10xf32>, vector<8x8xf32> -> vector<8x18xf32>
    %276 = arith.select %116, %275, %272 : vector<8x18xi1>, vector<8x18xf32>
    %277 = vector.extract_strided_slice %276 {offsets = [0, 0], sizes = [8, 8], strides = [1, 1]} : vector<8x18xf32> to vector<8x8xf32>
    %278 = arith.addf %253, %277 : vector<8x8xf32>
    %cst_75 = arith.constant 0.176776692 : f32
    %279 = vector.broadcast %cst_75 : f32 to vector<8x8xf32>
    %280 = arith.mulf %278, %279 : vector<8x8xf32>
    %cst_76 = arith.constant dense<0xFF800000> : vector<8xf32>
    %281 = vector.multi_reduction <maximumf>, %280, %cst_76 [1] : vector<8x8xf32> to vector<8xf32>
    %282 = vector.shape_cast %281 : vector<8xf32> to vector<8x1xf32>
    %283 = vector.broadcast %282 : vector<8x1xf32> to vector<8x8xf32>
    %284 = arith.subf %280, %283 : vector<8x8xf32>
    %285 = math.exp %284 : vector<8x8xf32>
    %cst_77 = arith.constant dense<0.000000e+00> : vector<8xf32>
    %286 = vector.multi_reduction <add>, %285, %cst_77 [1] : vector<8x8xf32> to vector<8xf32>
    %287 = vector.shape_cast %286 : vector<8xf32> to vector<8x1xf32>
    %288 = tpu.reciprocal %287 {approx = true} : vector<8x1xf32> -> vector<8x1xf32>
    %289 = vector.extract_strided_slice %77 {offsets = [0, 24], sizes = [8, 8], strides = [1, 1]} : vector<8x32xf32> to vector<8x8xf32>
    %cst_78 = arith.constant dense<0.000000e+00> : vector<8x8xf32>
    %290 = tpu.matmul %285, %289, %cst_78 {dimension_numbers = #tpu.dot_dimension_numbers<[1], [0], [0], [1], [0, 0, 1, 1], [], []>} : vector<8x8xf32>, vector<8x8xf32>, vector<8x8xf32> -> vector<8x8xf32>
    %291 = vector.broadcast %288 : vector<8x1xf32> to vector<8x8xf32>
    %292 = arith.mulf %290, %291 : vector<8x8xf32>
    %c24 = arith.constant 24 : index
    %c0_79 = arith.constant 0 : index
    %293 = vector.load %arg8[%c24, %c0_79] : memref<32x32xf32, #tpu.memory_space<vmem>>, vector<8x32xf32>
    %cst_80 = arith.constant dense<0.000000e+00> : vector<8x32xf32>
    %294 = tpu.matmul %292, %293, %cst_80 {dimension_numbers = #tpu.dot_dimension_numbers<[1], [0], [0], [1], [0, 0, 1, 1], [], []>} : vector<8x8xf32>, vector<8x32xf32>, vector<8x32xf32> -> vector<8x32xf32>
    %295 = arith.addf %250, %294 : vector<8x32xf32>
    %c3 = arith.constant 3 : index
    %c0_81 = arith.constant 0 : index
    %296 = vector.load %arg6[%c3, %c0_81] : memref<4x32xf32, #tpu.memory_space<vmem>>, vector<1x32xf32>
    %297 = vector.shape_cast %296 : vector<1x32xf32> to vector<32xf32>
    %298 = vector.shape_cast %297 : vector<32xf32> to vector<1x32xf32>
    %299 = vector.broadcast %298 : vector<1x32xf32> to vector<8x32xf32>
    %300 = arith.addf %295, %299 : vector<8x32xf32>
    %c0_82 = arith.constant 0 : index
    %c0_83 = arith.constant 0 : index
    %c0_84 = arith.constant 0 : index
    %301 = vector.load %arg9[%c0_82, %c0_83, %c0_84] : memref<1x8x32xf32, #tpu.memory_space<vmem>>, vector<1x8x32xf32>
    %302 = vector.shape_cast %301 : vector<1x8x32xf32> to vector<8x32xf32>
    %303 = vector.shape_cast %300 : vector<8x32xf32> to vector<1x8x32xf32>
    tpu.vector_store %arg9[%c0_82, %c0_83, %c0_84], %303 {strides = array<i32>} : memref<1x8x32xf32, #tpu.memory_space<vmem>>, vector<1x8x32xf32>,
    return
  }
  func.func @transform_0(%arg0: i32) -> (i32, i32, i32) {
    %c0_i32 = arith.constant 0 : i32
    %c0_i32_0 = arith.constant 0 : i32
    %c0_i32_1 = arith.constant 0 : i32
    return %arg0, %c0_i32, %c0_i32_0 : i32, i32, i32
  }
  func.func @transform_1(%arg0: i32) -> (i32, i32, i32) {
    %c0_i32 = arith.constant 0 : i32
    %c0_i32_0 = arith.constant 0 : i32
    %c0_i32_1 = arith.constant 0 : i32
    return %arg0, %c0_i32, %c0_i32_0 : i32, i32, i32
  }
  func.func @transform_2(%arg0: i32) -> (i32, i32) {
    %c0_i32 = arith.constant 0 : i32
    %c0_i32_0 = arith.constant 0 : i32
    %c0_i32_1 = arith.constant 0 : i32
    return %c0_i32, %c0_i32_0 : i32, i32
  }
  func.func @transform_3(%arg0: i32) -> (i32, i32) {
    %c0_i32 = arith.constant 0 : i32
    %c0_i32_0 = arith.constant 0 : i32
    %c0_i32_1 = arith.constant 0 : i32
    return %c0_i32, %c0_i32_0 : i32, i32
  }
  func.func @transform_4(%arg0: i32) -> (i32, i32, i32) {
    %c0_i32 = arith.constant 0 : i32
    %c0_i32_0 = arith.constant 0 : i32
    %c0_i32_1 = arith.constant 0 : i32
    %c0_i32_2 = arith.constant 0 : i32
    return %c0_i32, %c0_i32_0, %c0_i32_1 : i32, i32, i32
  }
  func.func @transform_5(%arg0: i32) -> (i32, i32) {
    %c0_i32 = arith.constant 0 : i32
    %c0_i32_0 = arith.constant 0 : i32
    %c0_i32_1 = arith.constant 0 : i32
    return %c0_i32, %c0_i32_0 : i32, i32
  }
  func.func @transform_6(%arg0: i32) -> (i32, i32) {
    %c0_i32 = arith.constant 0 : i32
    %c0_i32_0 = arith.constant 0 : i32
    %c0_i32_1 = arith.constant 0 : i32
    return %c0_i32, %c0_i32_0 : i32, i32
  }
  func.func @transform_7(%arg0: i32) -> (i32, i32) {
    %c0_i32 = arith.constant 0 : i32
    %c0_i32_0 = arith.constant 0 : i32
    %c0_i32_1 = arith.constant 0 : i32
    return %c0_i32, %c0_i32_0 : i32, i32
  }
  func.func @transform_8(%arg0: i32) -> (i32, i32, i32) {
    %c0_i32 = arith.constant 0 : i32
    %c0_i32_0 = arith.constant 0 : i32
    %c0_i32_1 = arith.constant 0 : i32
    return %arg0, %c0_i32, %c0_i32_0 : i32, i32, i32
  }
}

</mosaic_0001>

<llo_original>
// kernel: tpu_custom_call.1
$region0: #{tpu_custom_call.1}
  #allocation0 [shape = 'u32[]', space=smem, size = 0x4, offset = 0x4, fixed_abs, tag = 'smem constant byte address 0x4 - core index']
  #allocation1 [shape = 'u32[144,128]{1,0:T(1,128)}', space=vmem, size = 0x12000, scoped, tag = 'internal scratch']
  %s0 = inlined_call_operand.hbm [shape: f32[8,128], index: 0, kind: input, shape index: {}]
  %s1 = inlined_call_operand.hbm [shape: f32[8,128], index: 1, kind: output, shape index: {}]
  %s2 = sld [smem:[#allocation0]]
  $region18: #{tpu_custom_call.1} parent=0
    _
  %s4 = ssub.s32 1, %s2
  %s5 = scalar_select 0, %s4, %s2
  $region1: #{tpu_custom_call.1} parent=0
    #allocation2 [shape = 'u8[4096]{0}', space=vmem, size = 0x1000, scoped, tag = 'input window, operand 0, single buffered']
    #allocation3 [shape = 's32[1]{0}', space=sflag, size = 0x4, scoped, tag = 'scoped memory for tpu_custom_call.1']
    #allocation4 [shape = 's32[1]{0}', space=sflag, size = 0x4, scoped, tag = 'scoped memory for tpu_custom_call.1']
    #allocation5 [shape = 'u8[4096]{0}', space=vmem, size = 0x1000, scoped, tag = 'output window, operand 0, single buffered']
    %6 = vsyncpa [#allocation3], 0
    %7 = vsyncpa [#allocation4], 0
    // Predicated region
    $region2: #{tpu_custom_call.1} parent=1 // pred_check
      _
    $region3: #{tpu_custom_call.1} parent=1 // pred_check_branch
      %9 = sbr.rel (0) target = $region5
    $region4: #{tpu_custom_call.1} parent=1 // pred_region
      %s11 = ssub.s32 128, 128
      %12 = vsyncadd [#allocation3], %s11
      %s14 = sshll.u32 [#allocation2], 4
      %s15 = int_to_ptr.vmem [resolvable:$true] %s14
      %17 = dma.hbm_to_vmem [thread:$0]  %s0, 128, %s15, [#allocation3]
    $region5: #{tpu_custom_call.1} parent=1 // pred_fallthru
      _
    // Predicated region
    $region6: #{tpu_custom_call.1} parent=1 // pred_check
      _
    $region7: #{tpu_custom_call.1} parent=1 // pred_check_branch
      %19 = sbr.rel (0) target = $region9
    $region8: #{tpu_custom_call.1} parent=1 // pred_region
      %20 = dma.done [#allocation3], 128
    $region9: #{tpu_custom_call.1} parent=1 // pred_fallthru
      _
    %v21 = vld [vmem:[#allocation2] sm:$0xff]
    %s23 = sor.u32 256, 120
    %24 = vrot.lane.b32.xlu0 %v21, %s23
    %v25 = vpop.permute.xlu0 %24
    %26 = vst [vmem:[#allocation5] sm:$0xff] %v25
    // Predicated region
    $region10: #{tpu_custom_call.1} parent=1 // pred_check
      _
    $region11: #{tpu_custom_call.1} parent=1 // pred_check_branch
      %28 = sbr.rel (0) target = $region13
    $region12: #{tpu_custom_call.1} parent=1 // pred_region
      %s30 = ssub.s32 128, 128
      %31 = vsyncadd [#allocation4], %s30
      %s33 = sshll.u32 [#allocation5], 4
      %s34 = int_to_ptr.vmem [resolvable:$true] %s33
      %36 = dma.vmem_to_hbm [thread:$0]  %s34, 128, %s1, [#allocation4]
    $region13: #{tpu_custom_call.1} parent=1 // pred_fallthru
      _
    // Predicated region
    $region14: #{tpu_custom_call.1} parent=1 // pred_check
      _
    $region15: #{tpu_custom_call.1} parent=1 // pred_check_branch
      %38 = sbr.rel (0) target = $region17
    $region16: #{tpu_custom_call.1} parent=1 // pred_region
      %39 = dma.done [#allocation4], 128
    $region17: #{tpu_custom_call.1} parent=1 // pred_fallthru
      _
    %40 = vsyncpa [#allocation3], 1
    %41 = vsyncpa [#allocation4], 1

// kernel: tpu_custom_call.1
$region0: #{tpu_custom_call.1}
  #allocation0 [shape = 'u32[]', space=smem, size = 0x4, offset = 0x4, fixed_abs, tag = 'smem constant byte address 0x4 - core index']
  #allocation1 [shape = 'u32[144,128]{1,0:T(1,128)}', space=vmem, size = 0x12000, scoped, tag = 'internal scratch']
  %s0 = inlined_call_operand.vmem [shape: f32[2,8,32], index: 0, kind: input, shape index: {}]
  %s1 = inlined_call_operand.hbm [shape: f32[2,8,32], index: 1, kind: input, shape index: {}]
  %s2 = inlined_call_operand.vmem [shape: f32[32,9], index: 2, kind: input, shape index: {}]
  %s3 = inlined_call_operand.vmem [shape: f32[2,32], index: 3, kind: input, shape index: {}]
  %s4 = inlined_call_operand.hbm [shape: f32[3,32,32], index: 4, kind: input, shape index: {}]
  %s5 = inlined_call_operand.vmem [shape: f32[4,32], index: 5, kind: input, shape index: {}]
  %s6 = inlined_call_operand.vmem [shape: f32[2,32], index: 6, kind: input, shape index: {}]
  %s7 = inlined_call_operand.vmem [shape: f32[32,32], index: 7, kind: input, shape index: {}]
  %s8 = inlined_call_operand.hbm [shape: f32[2,8,32], index: 8, kind: output, shape index: {}]
  %s9 = sld [smem:[#allocation0]]
  $region73: #{tpu_custom_call.1} parent=0
    _
  %s11 = ssub.s32 1, %s9
  %s12 = scalar_select 0, %s11, %s9
  $region1: #{tpu_custom_call.1} parent=0
    #allocation2 [shape = 'u8[8192]{0}', space=vmem, size = 0x2000, scoped, tag = 'input window, operand 1']
    #allocation3 [shape = 's32[2]{0}', space=sflag, size = 0x8, scoped, tag = 'scoped memory for tpu_custom_call.1']
    #allocation4 [shape = 's32[2]{0}', space=sflag, size = 0x8, scoped, tag = 'scoped memory for tpu_custom_call.1']
    #allocation5 [shape = 'u8[49152]{0}', space=vmem, size = 0xc000, scoped, tag = 'input window, operand 4, single buffered']
    #allocation6 [shape = 's32[1]{0}', space=sflag, size = 0x4, scoped, tag = 'scoped memory for tpu_custom_call.1']
    #allocation7 [shape = 'u8[8192]{0}', space=vmem, size = 0x2000, scoped, tag = 'output window, operand 0']
    %13 = vsyncpa [#allocation3], 0
    %s14 = scalar_lea.sflag [#allocation3], 1
    %15 = vsyncpa %s14, 0
    %16 = vsyncpa [#allocation6], 0
    %17 = vsyncpa [#allocation4], 0
    %s18 = scalar_lea.sflag [#allocation4], 1
    %19 = vsyncpa %s18, 0
    loop: start=0, step=1, limit=4
    $region2: #{tpu_custom_call.1} parent=1 // loop_pre_header
      _
    $region3: #{tpu_custom_call.1} parent=1 // loop_header
      %s21 = sphi 0, %s25
      %p22 = scmp.ge.s32.totalorder %s21, 4
      %s31 = sphi 0, %s33
      %s34 = sphi 0, %s31
      %s35 = sphi 0, %s34
      %s51 = sphi 0, %s35
      %s57 = sphi 0, %s59
      %s60 = sphi 0, %s57
      %s61 = sphi 0, %s60
      %s77 = sphi 0, %s61
      %s81 = sphi 0, %s81
      %s83 = sphi 0, %s81
      %s84 = sphi 0, %s83
      %s98 = sphi 0, %s84
      %s102 = sphi 0, %s102
      %s104 = sphi 0, %s102
      %s105 = sphi 0, %s104
      %s119 = sphi 0, %s105
      %s123 = sphi 0, %s123
      %s125 = sphi 0, %s123
      %s126 = sphi 0, %s125
      %s140 = sphi 0, %s126
      %s144 = sphi 0, %s144
      %s146 = sphi 0, %s144
      %s147 = sphi 0, %s146
      %s161 = sphi 0, %s147
      %s165 = sphi 0, %s165
      %s167 = sphi 0, %s165
      %s168 = sphi 0, %s167
      %s182 = sphi 0, %s168
      %s186 = sphi 0, %s186
      %s188 = sphi 0, %s186
      %s189 = sphi 0, %s188
      %s203 = sphi 0, %s189
      %s209 = sphi 0, %s211
      %s212 = sphi 0, %s209
      %s213 = sphi 0, %s212
      %s229 = sphi 0, %s213
    $region4: #{tpu_custom_call.1} parent=1 // loop_header_branch
      %24 = sbr.rel (%p22) target = $region8
    $region5: #{tpu_custom_call.1} parent=1 // loop_body
      %s26 = ssub.s32 %s21, 1
      %s27 = ssub.s32 %s21, 2
      %s28 = sadd.s32 %s21, 1
      %s29 = ssub.s32 %s21, %s28
      %p30 = scmp.eq.s32.totalorder %s29, 0
      %s32 = sadd.s32 %s31, 1
      %s33 = scalar_select %p30, %s31, %s32
      %p36 = pneg %p30
      %p37 = scmp.eq.s32.totalorder %s21, 1
      %p38 = por %p36, %p37
      %p39 = scmp.ne.s32.totalorder %s31, %s34
      %p40 = scmp.eq.s32.totalorder %s21, 0
      %p41 = por %p39, %p40
      %p42 = scmp.ne.s32.totalorder %s31, %s34
      %p43 = scmp.eq.s32.totalorder %s26, 1
      %p44 = por %p42, %p43
      %p45 = scmp.ne.s32.totalorder %s34, %s35
      %p46 = scmp.eq.s32.totalorder %s26, 0
      %p47 = por %p45, %p46
      %p48 = scmp.ne.s32.totalorder %s34, %s35
      %p49 = scmp.eq.s32.totalorder %s27, 1
      %p50 = por %p48, %p49
      %p52 = scmp.ne.s32.totalorder %s35, %s51
      %p53 = scmp.eq.s32.totalorder %s27, 0
      %p54 = por %p52, %p53
      %s55 = ssub.s32 %s21, %s28
      %p56 = scmp.eq.s32.totalorder %s55, 0
      %s58 = sadd.s32 %s57, 1
      %s59 = scalar_select %p56, %s57, %s58
      %p62 = pneg %p56
      %p63 = scmp.eq.s32.totalorder %s21, 1
      %p64 = por %p62, %p63
      %p65 = scmp.ne.s32.totalorder %s57, %s60
      %p66 = scmp.eq.s32.totalorder %s21, 0
      %p67 = por %p65, %p66
      %p68 = scmp.ne.s32.totalorder %s57, %s60
      %p69 = scmp.eq.s32.totalorder %s26, 1
      %p70 = por %p68, %p69
      %p71 = scmp.ne.s32.totalorder %s60, %s61
      %p72 = scmp.eq.s32.totalorder %s26, 0
      %p73 = por %p71, %p72
      %p74 = scmp.ne.s32.totalorder %s60, %s61
      %p75 = scmp.eq.s32.totalorder %s27, 1
      %p76 = por %p74, %p75
      %p78 = scmp.ne.s32.totalorder %s61, %s77
      %p79 = scmp.eq.s32.totalorder %s27, 0
      %p80 = por %p78, %p79
      %s82 = sadd.s32 %s81, 1
      %p85 = scmp.eq.s32.totalorder %s21, 1
      %p86 = scmp.ne.s32.totalorder %s81, %s83
      %p87 = scmp.eq.s32.totalorder %s21, 0
      %p88 = por %p86, %p87
      %p89 = scmp.ne.s32.totalorder %s81, %s83
      %p90 = scmp.eq.s32.totalorder %s26, 1
      %p91 = por %p89, %p90
      %p92 = scmp.ne.s32.totalorder %s83, %s84
      %p93 = scmp.eq.s32.totalorder %s26, 0
      %p94 = por %p92, %p93
      %p95 = scmp.ne.s32.totalorder %s83, %s84
      %p96 = scmp.eq.s32.totalorder %s27, 1
      %p97 = por %p95, %p96
      %p99 = scmp.ne.s32.totalorder %s84, %s98
      %p100 = scmp.eq.s32.totalorder %s27, 0
      %p101 = por %p99, %p100
      %s103 = sadd.s32 %s102, 1
      %p106 = scmp.eq.s32.totalorder %s21, 1
      %p107 = scmp.ne.s32.totalorder %s102, %s104
      %p108 = scmp.eq.s32.totalorder %s21, 0
      %p109 = por %p107, %p108
      %p110 = scmp.ne.s32.totalorder %s102, %s104
      %p111 = scmp.eq.s32.totalorder %s26, 1
      %p112 = por %p110, %p111
      %p113 = scmp.ne.s32.totalorder %s104, %s105
      %p114 = scmp.eq.s32.totalorder %s26, 0
      %p115 = por %p113, %p114
      %p116 = scmp.ne.s32.totalorder %s104, %s105
      %p117 = scmp.eq.s32.totalorder %s27, 1
      %p118 = por %p116, %p117
      %p120 = scmp.ne.s32.totalorder %s105, %s119
      %p121 = scmp.eq.s32.totalorder %s27, 0
      %p122 = por %p120, %p121
      %s124 = sadd.s32 %s123, 1
      %p127 = scmp.eq.s32.totalorder %s21, 1
      %p128 = scmp.ne.s32.totalorder %s123, %s125
      %p129 = scmp.eq.s32.totalorder %s21, 0
      %p130 = por %p128, %p129
      %p131 = scmp.ne.s32.totalorder %s123, %s125
      %p132 = scmp.eq.s32.totalorder %s26, 1
      %p133 = por %p131, %p132
      %p134 = scmp.ne.s32.totalorder %s125, %s126
      %p135 = scmp.eq.s32.totalorder %s26, 0
      %p136 = por %p134, %p135
      %p137 = scmp.ne.s32.totalorder %s125, %s126
      %p138 = scmp.eq.s32.totalorder %s27, 1
      %p139 = por %p137, %p138
      %p141 = scmp.ne.s32.totalorder %s126, %s140
      %p142 = scmp.eq.s32.totalorder %s27, 0
      %p143 = por %p141, %p142
      %s145 = sadd.s32 %s144, 1
      %p148 = scmp.eq.s32.totalorder %s21, 1
      %p149 = scmp.ne.s32.totalorder %s144, %s146
      %p150 = scmp.eq.s32.totalorder %s21, 0
      %p151 = por %p149, %p150
      %p152 = scmp.ne.s32.totalorder %s144, %s146
      %p153 = scmp.eq.s32.totalorder %s26, 1
      %p154 = por %p152, %p153
      %p155 = scmp.ne.s32.totalorder %s146, %s147
      %p156 = scmp.eq.s32.totalorder %s26, 0
      %p157 = por %p155, %p156
      %p158 = scmp.ne.s32.totalorder %s146, %s147
      %p159 = scmp.eq.s32.totalorder %s27, 1
      %p160 = por %p158, %p159
      %p162 = scmp.ne.s32.totalorder %s147, %s161
      %p163 = scmp.eq.s32.totalorder %s27, 0
      %p164 = por %p162, %p163
      %s166 = sadd.s32 %s165, 1
      %p169 = scmp.eq.s32.totalorder %s21, 1
      %p170 = scmp.ne.s32.totalorder %s165, %s167
      %p171 = scmp.eq.s32.totalorder %s21, 0
      %p172 = por %p170, %p171
      %p173 = scmp.ne.s32.totalorder %s165, %s167
      %p174 = scmp.eq.s32.totalorder %s26, 1
      %p175 = por %p173, %p174
      %p176 = scmp.ne.s32.totalorder %s167, %s168
      %p177 = scmp.eq.s32.totalorder %s26, 0
      %p178 = por %p176, %p177
      %p179 = scmp.ne.s32.totalorder %s167, %s168
      %p180 = scmp.eq.s32.totalorder %s27, 1
      %p181 = por %p179, %p180
      %p183 = scmp.ne.s32.totalorder %s168, %s182
      %p184 = scmp.eq.s32.totalorder %s27, 0
      %p185 = por %p183, %p184
      %s187 = sadd.s32 %s186, 1
      %p190 = scmp.eq.s32.totalorder %s21, 1
      %p191 = scmp.ne.s32.totalorder %s186, %s188
      %p192 = scmp.eq.s32.totalorder %s21, 0
      %p193 = por %p191, %p192
      %p194 = scmp.ne.s32.totalorder %s186, %s188
      %p195 = scmp.eq.s32.totalorder %s26, 1
      %p196 = por %p194, %p195
      %p197 = scmp.ne.s32.totalorder %s188, %s189
      %p198 = scmp.eq.s32.totalorder %s26, 0
      %p199 = por %p197, %p198
      %p200 = scmp.ne.s32.totalorder %s188, %s189
      %p201 = scmp.eq.s32.totalorder %s27, 1
      %p202 = por %p200, %p201
      %p204 = scmp.ne.s32.totalorder %s189, %s203
      %p205 = scmp.eq.s32.totalorder %s27, 0
      %p206 = por %p204, %p205
      %s207 = ssub.s32 %s21, %s28
      %p208 = scmp.eq.s32.totalorder %s207, 0
      %s210 = sadd.s32 %s209, 1
      %s211 = scalar_select %p208, %s209, %s210
      %p214 = pneg %p208
      %p215 = scmp.eq.s32.totalorder %s21, 1
      %p216 = por %p214, %p215
      %p217 = scmp.ne.s32.totalorder %s209, %s212
      %p218 = scmp.eq.s32.totalorder %s21, 0
      %p219 = por %p217, %p218
      %p220 = scmp.ne.s32.totalorder %s209, %s212
      %p221 = scmp.eq.s32.totalorder %s26, 1
      %p222 = por %p220, %p221
      %p223 = scmp.ne.s32.totalorder %s212, %s213
      %p224 = scmp.eq.s32.totalorder %s26, 0
      %p225 = por %p223, %p224
      %p226 = scmp.ne.s32.totalorder %s212, %s213
      %p227 = scmp.eq.s32.totalorder %s27, 1
      %p228 = por %p226, %p227
      %p230 = scmp.ne.s32.totalorder %s213, %s229
      %p231 = scmp.eq.s32.totalorder %s27, 0
      %p232 = por %p230, %p231
      %p233 = scmp.le.s32.totalorder 1, %s21
      %p234 = scmp.lt.s32.totalorder %s21, 3
      %p235 = pnand %p233, %p234
      %p236 = pneg %p235
      // Predicated region
      $region9: #{tpu_custom_call.1} parent=5 // pred_check
        _
      $region10: #{tpu_custom_call.1} parent=5 // pred_check_branch
        %238 = sbr.rel (%p235) target = $region12
      $region11: #{tpu_custom_call.1} parent=5 // pred_region
        %s239 = ssub.s32 %s21, 1
        // Predicated region
        $region13: #{tpu_custom_call.1} parent=11 // pred_check
          %p240 = pneg %p94
        $region14: #{tpu_custom_call.1} parent=11 // pred_check_branch
          %242 = sbr.rel (%p240) target = $region16
        $region15: #{tpu_custom_call.1} parent=11 // pred_region
          _
        $region16: #{tpu_custom_call.1} parent=11 // pred_fallthru
          _
        // Predicated region
        $region17: #{tpu_custom_call.1} parent=11 // pred_check
          %p243 = pneg %p115
        $region18: #{tpu_custom_call.1} parent=11 // pred_check_branch
          %245 = sbr.rel (%p243) target = $region20
        $region19: #{tpu_custom_call.1} parent=11 // pred_region
          _
        $region20: #{tpu_custom_call.1} parent=11 // pred_fallthru
          _
        // Predicated region
        $region21: #{tpu_custom_call.1} parent=11 // pred_check
          %p246 = pneg %p136
        $region22: #{tpu_custom_call.1} parent=11 // pred_check_branch
          %248 = sbr.rel (%p246) target = $region24
        $region23: #{tpu_custom_call.1} parent=11 // pred_region
          %s250 = ssub.s32 1536, 1536
          %251 = vsyncadd [#allocation6], %s250
          %s252 = sshll.u32 [#allocation5], 4
          %s253 = int_to_ptr.vmem [resolvable:$true] %s252
          %258 = dma.hbm_to_vmem [thread:$0]  %s4, 1536, %s253, [#allocation6], 128, 128, 8
        $region24: #{tpu_custom_call.1} parent=11 // pred_fallthru
          _
        // Predicated region
        $region25: #{tpu_custom_call.1} parent=11 // pred_check
          %p259 = pneg %p157
        $region26: #{tpu_custom_call.1} parent=11 // pred_check_branch
          %261 = sbr.rel (%p259) target = $region28
        $region27: #{tpu_custom_call.1} parent=11 // pred_region
          _
        $region28: #{tpu_custom_call.1} parent=11 // pred_fallthru
          _
        // Predicated region
        $region29: #{tpu_custom_call.1} parent=11 // pred_check
          %p262 = pneg %p178
        $region30: #{tpu_custom_call.1} parent=11 // pred_check_branch
          %264 = sbr.rel (%p262) target = $region32
        $region31: #{tpu_custom_call.1} parent=11 // pred_region
          _
        $region32: #{tpu_custom_call.1} parent=11 // pred_fallthru
          _
        // Predicated region
        $region33: #{tpu_custom_call.1} parent=11 // pred_check
          %p265 = pneg %p199
        $region34: #{tpu_custom_call.1} parent=11 // pred_check_branch
          %267 = sbr.rel (%p265) target = $region36
        $region35: #{tpu_custom_call.1} parent=11 // pred_region
          _
        $region36: #{tpu_custom_call.1} parent=11 // pred_fallthru
          _
      $region12: #{tpu_custom_call.1} parent=5 // pred_fallthru
        _
      %p268 = scmp.lt.s32.totalorder %s21, 2
      // Predicated region
      $region37: #{tpu_custom_call.1} parent=5 // pred_check
        %p269 = pneg %p268
      $region38: #{tpu_custom_call.1} parent=5 // pred_check_branch
        %271 = sbr.rel (%p269) target = $region40
      $region39: #{tpu_custom_call.1} parent=5 // pred_region
        // Predicated region
        $region41: #{tpu_custom_call.1} parent=39 // pred_check
          %p272 = pneg %p41
        $region42: #{tpu_custom_call.1} parent=39 // pred_check_branch
          %274 = sbr.rel (%p272) target = $region44
        $region43: #{tpu_custom_call.1} parent=39 // pred_region
          %p275 = scmp.lt.s32.totalorder %s21, 1
          %s276 = scalar_select %p275, %s21, 1
          %s277 = smul.addr %s276, 8
          %s278 = scalar_lea.vmem %s0, %s277
        $region44: #{tpu_custom_call.1} parent=39 // pred_fallthru
          _
        // Predicated region
        $region45: #{tpu_custom_call.1} parent=39 // pred_check
          %p279 = pneg %p67
        $region46: #{tpu_custom_call.1} parent=39 // pred_check_branch
          %281 = sbr.rel (%p279) target = $region48
        $region47: #{tpu_custom_call.1} parent=39 // pred_region
          %s282 = sand.u32 %s57, 1
          %s283 = scalar_lea.sflag [#allocation3], %s282
          %s284 = sand.u32 %s57, 1
          %s285 = smul.addr %s284, 8
          %s286 = scalar_lea.vmem [#allocation2], %s285
          %s288 = ssub.s32 128, 128
          %289 = vsyncadd %s283, %s288
          %s290 = smul.addr %s21, 128
          %s291 = scalar_lea.hbm %s1, %s290
          %s293 = sshll.u32 %s286, 4
          %s294 = int_to_ptr.vmem [resolvable:$true] %s293
          %296 = dma.hbm_to_vmem [thread:$0]  %s291, 128, %s294, %s283
        $region48: #{tpu_custom_call.1} parent=39 // pred_fallthru
          _
      $region40: #{tpu_custom_call.1} parent=5 // pred_fallthru
        _
      %p297 = scmp.le.s32.totalorder 1, %s21
      %p298 = scmp.lt.s32.totalorder %s21, 3
      %p299 = pnand %p297, %p298
      %p300 = pneg %p299
      // Predicated region
      $region49: #{tpu_custom_call.1} parent=5 // pred_check
        _
      $region50: #{tpu_custom_call.1} parent=5 // pred_check_branch
        %302 = sbr.rel (%p299) target = $region52
      $region51: #{tpu_custom_call.1} parent=5 // pred_region
        %s303 = ssub.s32 %s21, 1
        %s304 = sand.u32 %s60, 1
        %s305 = scalar_lea.sflag [#allocation3], %s304
        %s306 = sand.u32 %s60, 1
        %s307 = smul.addr %s306, 8
        %s308 = scalar_lea.vmem [#allocation2], %s307
        // Predicated region
        $region53: #{tpu_custom_call.1} parent=51 // pred_check
          %p309 = pneg %p73
        $region54: #{tpu_custom_call.1} parent=51 // pred_check_branch
          %311 = sbr.rel (%p309) target = $region56
        $region55: #{tpu_custom_call.1} parent=51 // pred_region
          %312 = dma.done %s305, 128
        $region56: #{tpu_custom_call.1} parent=51 // pred_fallthru
          _
        // Predicated region
        $region57: #{tpu_custom_call.1} parent=51 // pred_check
          %p313 = pneg %p136
        $region58: #{tpu_custom_call.1} parent=51 // pred_check_branch
          %315 = sbr.rel (%p313) target = $region60
        $region59: #{tpu_custom_call.1} parent=51 // pred_region
          %316 = dma.done [#allocation6], 1536
        $region60: #{tpu_custom_call.1} parent=51 // pred_fallthru
          _
        %p317 = scmp.lt.s32.totalorder %s26, 1
        %s318 = scalar_select %p317, %s26, 1
        %s319 = smul.addr %s318, 8
        %s320 = scalar_lea.vmem %s0, %s319
        %p321 = pneg %p47
        %p322 = pneg %p44
        %s323 = sand.u32 %s60, 1
        %s324 = scalar_lea.sflag [#allocation3], %s323
        %s325 = sand.u32 %s60, 1
        %s326 = smul.addr %s325, 8
        %s327 = scalar_lea.vmem [#allocation2], %s326
        %p328 = pneg %p73
        %p329 = pneg %p70
        %p330 = pneg %p94
        %p331 = pneg %p91
        %p332 = pneg %p115
        %p333 = pneg %p112
        %p334 = pneg %p136
        %p335 = pneg %p133
        %p336 = pneg %p157
        %p337 = pneg %p154
        %p338 = pneg %p178
        %p339 = pneg %p175
        %p340 = pneg %p199
        %p341 = pneg %p196
        %p342 = pneg %p225
        %p343 = pneg %p222
        %s344 = sand.u32 %s212, 1
        %s345 = scalar_lea.sflag [#allocation4], %s344
        %s346 = sand.u32 %s212, 1
        %s347 = smul.addr %s346, 8
        %s348 = scalar_lea.vmem [#allocation7], %s347
        %p349 = scmp.lt.s32.totalorder %s26, 1
        %s350 = scalar_select %p349, %s26, 1
        %s351 = smul.addr %s350, 8
        %s352 = scalar_lea.vmem %s0, %s351
        %v353 = vld [vmem:[%s3] sm:$0x1]
        %v354 = vld [vmem:[%s3 + $0x1] sm:$0x1]
        %v355 = vld [vmem:[%s352] sm:$0xff]
        %vm356 = vcmask 261120
        %v357 = vsel %vm356, %v355, 0.0
        %358 = vadd.xlane.f32.xlu0 %v357
        %v359 = vpop.xlane.xlu0 %358
        %v360 = vrcp.pop 32.0
        %v361 = vmul.f32 %v359, %v360
        %v362 = vsub.f32 %v355, %v361
        %v363 = vmul.f32 %v362, %v362
        %v364 = vsel %vm356, %v363, 0.0
        %365 = vadd.xlane.f32.xlu0 %v364
        %v366 = vpop.xlane.xlu0 %365
        %v367 = vmul.f32 %v366, %v360
        %v368 = vadd.f32 %v367, 1e-05
        %v369 = vrsqrt.pop %v368
        %v370 = vmul.f32 %v362, %v369
        %v371 = vlaneseq
        %v372 = vshrl.u32 %v371, 7
        %v373 = vsub.s32 0, %v372
        %v374 = vrot.slane %v353, %v373
        %v375 = vmul.f32 %v370, %v374
        %v376 = vlaneseq
        %v377 = vshrl.u32 %v376, 7
        %v378 = vsub.s32 0, %v377
        %v379 = vrot.slane %v354, %v378
        %v380 = vadd.f32 %v375, %v379
        %v381 = vld [vmem:[%s308] sm:$0xff]
        %v382 = vsel %vm356, %v381, 0.0
        %383 = vadd.xlane.f32.xlu0 %v382
        %v384 = vpop.xlane.xlu0 %383
        %v385 = vmul.f32 %v384, %v360
        %v386 = vsub.f32 %v381, %v385
        %v387 = vmul.f32 %v386, %v386
        %v388 = vsel %vm356, %v387, 0.0
        %389 = vadd.xlane.f32.xlu0 %v388
        %v390 = vpop.xlane.xlu0 %389
        %v391 = vmul.f32 %v390, %v360
        %v392 = vadd.f32 %v391, 1e-05
        %v393 = vrsqrt.pop %v392
        %v394 = vmul.f32 %v386, %v393
        %v395 = vmul.f32 %v394, %v374
        %v396 = vadd.f32 %v395, %v379
        %v397 = vld [vmem:[#allocation5] sm:$0xff]
        %v398 = vld [vmem:[#allocation5 + $0x8] sm:$0xff]
        %v399 = vld [vmem:[#allocation5 + $0x10] sm:$0xff]
        %v400 = vld [vmem:[#allocation5 + $0x18] sm:$0xff]
        %v401 = vld [vmem:[%s5] sm:$0x1]
        %v402 = vlaneseq
        %v403 = vshrl.u32 %v402, 7
        %v404 = vsub.s32 0, %v403
        %v405 = vrot.slane %v401, %v404
        %v407 = vsel %vm356, %v380, 0
        %409 = vmatprep.subr.mxu0 0.0
        %410 = vmatpush1.msra.mxu0 %v397
        %411 = vmatprep.subr.mxu0 0.0
        %412 = vmatpush1.msra.mxu0 %v398
        %413 = vmatprep.subr.mxu0 0.0
        %414 = vmatpush1.msra.mxu0 %v399
        %415 = vmatprep.subr.mxu0 0.0
        %416 = vmatpush1.msra.mxu0 %v400
        %417 = vmatprep.subr.mxu0 0.0
        %418 = vmatpush1.msra.mxu0 0.0
        %419 = vmatprep.subr.mxu0 0.0
        %420 = vmatpush1.msra.mxu0 0.0
        %421 = vmatprep.subr.mxu0 0.0
        %422 = vmatpush1.msra.mxu0 0.0
        %423 = vmatprep.subr.mxu0 0.0
        %424 = vmatpush1.msra.mxu0 0.0
        %425 = vmatprep.subr.mxu0 0.0
        %426 = vmatpush1.msra.mxu0 0.0
        %427 = vmatprep.subr.mxu0 0.0
        %428 = vmatpush1.msra.mxu0 0.0
        %429 = vmatprep.subr.mxu0 0.0
        %430 = vmatpush1.msra.mxu0 0.0
        %431 = vmatprep.subr.mxu0 0.0
        %432 = vmatpush1.msra.mxu0 0.0
        %433 = vmatprep.subr.mxu0 0.0
        %434 = vmatpush1.msra.mxu0 0.0
        %435 = vmatprep.subr.mxu0 0.0
        %436 = vmatpush1.msra.mxu0 0.0
        %437 = vmatprep.subr.mxu0 0.0
        %438 = vmatpush1.msra.mxu0 0.0
        %439 = vmatprep.subr.mxu0 0.0
        %440 = vmatpush1.msra.mxu0 0.0
        %441 = vmatprep.subr.mxu0 0.0
        %442 = vmatpush1.msra.mxu0 0.0
        %443 = vmatprep.subr.mxu0 0.0
        %444 = vmatpush1.msra.mxu0 0.0
        %445 = vmatprep.subr.mxu0 0.0
        %446 = vmatpush1.msra.mxu0 0.0
        %447 = vmatprep.subr.mxu0 0.0
        %448 = vmatpush1.msra.mxu0 0.0
        %449 = vmatprep.subr.mxu0 0.0
        %450 = vmatpush1.msra.mxu0 0.0
        %451 = vmatprep.subr.mxu0 0.0
        %452 = vmatpush1.msra.mxu0 0.0
        %453 = vmatprep.subr.mxu0 0.0
        %454 = vmatpush1.msra.mxu0 0.0
        %455 = vmatprep.subr.mxu0 0.0
        %456 = vmatpush1.msra.mxu0 0.0
        %457 = vmatprep.subr.mxu0 0.0
        %458 = vmatpush1.msra.mxu0 0.0
        %459 = vmatprep.subr.mxu0 0.0
        %460 = vmatpush1.msra.mxu0 0.0
        %461 = vmatprep.subr.mxu0 0.0
        %462 = vmatpush1.msra.mxu0 0.0
        %463 = vmatprep.subr.mxu0 0.0
        %464 = vmatpush1.msra.mxu0 0.0
        %465 = vmatprep.subr.mxu0 0.0
        %466 = vmatpush1.msra.mxu0 0.0
        %467 = vmatprep.subr.mxu0 0.0
        %468 = vmatpush1.msra.mxu0 0.0
        %469 = vmatprep.subr.mxu0 0.0
        %470 = vmatpush1.msra.mxu0 0.0
        %471 = vmatprep.subr.mxu0 0.0
        %472 = vmatpush1.msra.mxu0 0.0
        %473 = vmatprep.mubr.f32.mxu0 0.0
        %474 = vmatmul.mubr.f32.gmra.mrb[0].mxu0 %v407
        %v475 = vpop.f32.mrb[0].mxu0
        %v476 = vadd.f32 %v405, %v475
        %v477 = vpop.f32.mrb[0].mxu0
        %478 = vdwg.mxu0
        %s479 = scalar_lea.vmem [#allocation5], 32
        %v480 = vld [vmem:[%s479] sm:$0xff]
        %v481 = vld [vmem:[%s479 + $0x8] sm:$0xff]
        %v482 = vld [vmem:[%s479 + $0x10] sm:$0xff]
        %v483 = vld [vmem:[%s479 + $0x18] sm:$0xff]
        %v484 = vld [vmem:[%s5 + $0x1] sm:$0x1]
        %v485 = vlaneseq
        %v486 = vshrl.u32 %v485, 7
        %v487 = vsub.s32 0, %v486
        %v488 = vrot.slane %v484, %v487
        %v490 = vsel %vm356, %v396, 0
        %492 = vmatprep.subr.mxu0 0.0
        %493 = vmatpush1.msra.mxu0 %v480
        %494 = vmatprep.subr.mxu0 0.0
        %495 = vmatpush1.msra.mxu0 %v481
        %496 = vmatprep.subr.mxu0 0.0
        %497 = vmatpush1.msra.mxu0 %v482
        %498 = vmatprep.subr.mxu0 0.0
        %499 = vmatpush1.msra.mxu0 %v483
        %500 = vmatprep.subr.mxu0 0.0
        %501 = vmatpush1.msra.mxu0 0.0
        %502 = vmatprep.subr.mxu0 0.0
        %503 = vmatpush1.msra.mxu0 0.0
        %504 = vmatprep.subr.mxu0 0.0
        %505 = vmatpush1.msra.mxu0 0.0
        %506 = vmatprep.subr.mxu0 0.0
        %507 = vmatpush1.msra.mxu0 0.0
        %508 = vmatprep.subr.mxu0 0.0
        %509 = vmatpush1.msra.mxu0 0.0
        %510 = vmatprep.subr.mxu0 0.0
        %511 = vmatpush1.msra.mxu0 0.0
        %512 = vmatprep.subr.mxu0 0.0
        %513 = vmatpush1.msra.mxu0 0.0
        %514 = vmatprep.subr.mxu0 0.0
        %515 = vmatpush1.msra.mxu0 0.0
        %516 = vmatprep.subr.mxu0 0.0
        %517 = vmatpush1.msra.mxu0 0.0
        %518 = vmatprep.subr.mxu0 0.0
        %519 = vmatpush1.msra.mxu0 0.0
        %520 = vmatprep.subr.mxu0 0.0
        %521 = vmatpush1.msra.mxu0 0.0
        %522 = vmatprep.subr.mxu0 0.0
        %523 = vmatpush1.msra.mxu0 0.0
        %524 = vmatprep.subr.mxu0 0.0
        %525 = vmatpush1.msra.mxu0 0.0
        %526 = vmatprep.subr.mxu0 0.0
        %527 = vmatpush1.msra.mxu0 0.0
        %528 = vmatprep.subr.mxu0 0.0
        %529 = vmatpush1.msra.mxu0 0.0
        %530 = vmatprep.subr.mxu0 0.0
        %531 = vmatpush1.msra.mxu0 0.0
        %532 = vmatprep.subr.mxu0 0.0
        %533 = vmatpush1.msra.mxu0 0.0
        %534 = vmatprep.subr.mxu0 0.0
        %535 = vmatpush1.msra.mxu0 0.0
        %536 = vmatprep.subr.mxu0 0.0
        %537 = vmatpush1.msra.mxu0 0.0
        %538 = vmatprep.subr.mxu0 0.0
        %539 = vmatpush1.msra.mxu0 0.0
        %540 = vmatprep.subr.mxu0 0.0
        %541 = vmatpush1.msra.mxu0 0.0
        %542 = vmatprep.subr.mxu0 0.0
        %543 = vmatpush1.msra.mxu0 0.0
        %544 = vmatprep.subr.mxu0 0.0
        %545 = vmatpush1.msra.mxu0 0.0
        %546 = vmatprep.subr.mxu0 0.0
        %547 = vmatpush1.msra.mxu0 0.0
        %548 = vmatprep.subr.mxu0 0.0
        %549 = vmatpush1.msra.mxu0 0.0
        %550 = vmatprep.subr.mxu0 0.0
        %551 = vmatpush1.msra.mxu0 0.0
        %552 = vmatprep.subr.mxu0 0.0
        %553 = vmatpush1.msra.mxu0 0.0
        %554 = vmatprep.subr.mxu0 0.0
        %555 = vmatpush1.msra.mxu0 0.0
        %556 = vmatprep.mubr.f32.mxu0 0.0
        %557 = vmatmul.mubr.f32.gmra.mrb[0].mxu0 %v490
        %v558 = vpop.f32.mrb[0].mxu0
        %v559 = vadd.f32 %v488, %v558
        %v560 = vpop.f32.mrb[0].mxu0
        %561 = vdwg.mxu0
        %s562 = scalar_lea.vmem [#allocation5], 64
        %v563 = vld [vmem:[%s562] sm:$0xff]
        %v564 = vld [vmem:[%s562 + $0x8] sm:$0xff]
        %v565 = vld [vmem:[%s562 + $0x10] sm:$0xff]
        %v566 = vld [vmem:[%s562 + $0x18] sm:$0xff]
        %v567 = vld [vmem:[%s5 + $0x2] sm:$0x1]
        %v568 = vlaneseq
        %v569 = vshrl.u32 %v568, 7
        %v570 = vsub.s32 0, %v569
        %v571 = vrot.slane %v567, %v570
        %572 = vmatprep.subr.mxu0 0.0
        %573 = vmatpush1.msra.mxu0 %v563
        %574 = vmatprep.subr.mxu0 0.0
        %575 = vmatpush1.msra.mxu0 %v564
        %576 = vmatprep.subr.mxu0 0.0
        %577 = vmatpush1.msra.mxu0 %v565
        %578 = vmatprep.subr.mxu0 0.0
        %579 = vmatpush1.msra.mxu0 %v566
        %580 = vmatprep.subr.mxu0 0.0
        %581 = vmatpush1.msra.mxu0 0.0
        %582 = vmatprep.subr.mxu0 0.0
        %583 = vmatpush1.msra.mxu0 0.0
        %584 = vmatprep.subr.mxu0 0.0
        %585 = vmatpush1.msra.mxu0 0.0
        %586 = vmatprep.subr.mxu0 0.0
        %587 = vmatpush1.msra.mxu0 0.0
        %588 = vmatprep.subr.mxu0 0.0
        %589 = vmatpush1.msra.mxu0 0.0
        %590 = vmatprep.subr.mxu0 0.0
        %591 = vmatpush1.msra.mxu0 0.0
        %592 = vmatprep.subr.mxu0 0.0
        %593 = vmatpush1.msra.mxu0 0.0
        %594 = vmatprep.subr.mxu0 0.0
        %595 = vmatpush1.msra.mxu0 0.0
        %596 = vmatprep.subr.mxu0 0.0
        %597 = vmatpush1.msra.mxu0 0.0
        %598 = vmatprep.subr.mxu0 0.0
        %599 = vmatpush1.msra.mxu0 0.0
        %600 = vmatprep.subr.mxu0 0.0
        %601 = vmatpush1.msra.mxu0 0.0
        %602 = vmatprep.subr.mxu0 0.0
        %603 = vmatpush1.msra.mxu0 0.0
        %604 = vmatprep.subr.mxu0 0.0
        %605 = vmatpush1.msra.mxu0 0.0
        %606 = vmatprep.subr.mxu0 0.0
        %607 = vmatpush1.msra.mxu0 0.0
        %608 = vmatprep.subr.mxu0 0.0
        %609 = vmatpush1.msra.mxu0 0.0
        %610 = vmatprep.subr.mxu0 0.0
        %611 = vmatpush1.msra.mxu0 0.0
        %612 = vmatprep.subr.mxu0 0.0
        %613 = vmatpush1.msra.mxu0 0.0
        %614 = vmatprep.subr.mxu0 0.0
        %615 = vmatpush1.msra.mxu0 0.0
        %616 = vmatprep.subr.mxu0 0.0
        %617 = vmatpush1.msra.mxu0 0.0
        %618 = vmatprep.subr.mxu0 0.0
        %619 = vmatpush1.msra.mxu0 0.0
        %620 = vmatprep.subr.mxu0 0.0
        %621 = vmatpush1.msra.mxu0 0.0
        %622 = vmatprep.subr.mxu0 0.0
        %623 = vmatpush1.msra.mxu0 0.0
        %624 = vmatprep.subr.mxu0 0.0
        %625 = vmatpush1.msra.mxu0 0.0
        %626 = vmatprep.subr.mxu0 0.0
        %627 = vmatpush1.msra.mxu0 0.0
        %628 = vmatprep.subr.mxu0 0.0
        %629 = vmatpush1.msra.mxu0 0.0
        %630 = vmatprep.subr.mxu0 0.0
        %631 = vmatpush1.msra.mxu0 0.0
        %632 = vmatprep.subr.mxu0 0.0
        %633 = vmatpush1.msra.mxu0 0.0
        %634 = vmatprep.subr.mxu0 0.0
        %635 = vmatpush1.msra.mxu0 0.0
        %636 = vmatprep.mubr.f32.mxu0 0.0
        %637 = vmatmul.mubr.f32.gmra.mrb[0].mxu0 %v490
        %v638 = vpop.f32.mrb[0].mxu0
        %v639 = vadd.f32 %v571, %v638
        %v640 = vpop.f32.mrb[0].mxu0
        %641 = vdwg.mxu0
        %v642 = vld [vmem:[%s6] sm:$0x1]
        %v643 = vlaneseq
        %v644 = vshrl.u32 %v643, 7
        %v645 = vsub.s32 0, %v644
        %v646 = vrot.slane %v642, %v645
        %v647 = vadd.f32 %v476, %v646
        %v648 = vld [vmem:[%s6 + $0x1] sm:$0x1]
        %v649 = vlaneseq
        %v650 = vshrl.u32 %v649, 7
        %v651 = vsub.s32 0, %v650
        %v652 = vrot.slane %v648, %v651
        %v653 = vadd.f32 %v476, %v652
        %v654 = vld [vmem:[%s2] sm:$0xff]
        %v655 = vld [vmem:[%s2 + $0x8] sm:$0xff]
        %v656 = vld [vmem:[%s2 + $0x10] sm:$0xff]
        %v657 = vld [vmem:[%s2 + $0x18] sm:$0xff]
        %v658 = vlaneseq
        %v659 = vshrl.u32 %v658, 7
        %v660 = vsub.s32 8, %v659
        %v661 = vand.u32 %v660, 1
        %vm662 = vcmp.eq.s32.totalorder %v661, 1
        %v663 = vshra.s32 %v660, 1
        %v664 = vand.u32 %v663, 1
        %vm665 = vcmp.eq.s32.totalorder %v664, 1
        %v666 = vshra.s32 %v660, 2
        %v667 = vand.u32 %v666, 1
        %vm668 = vcmp.eq.s32.totalorder %v667, 1
        %v669 = vshra.s32 %v660, 3
        %v670 = vand.u32 %v669, 1
        %vm671 = vcmp.eq.s32.totalorder %v670, 1
        %vm672 = vcmask 64512
        %v674 = vsel %vm672, %v653, 0
        %676 = vmatprep.subr.mxu0 0.0
        %677 = vmatpush1.msra.mxu0 %v654
        %678 = vmatprep.subr.mxu0 0.0
        %679 = vmatpush1.msra.mxu0 0.0
        %680 = vmatprep.subr.mxu0 0.0
        %681 = vmatpush1.msra.mxu0 0.0
        %682 = vmatprep.subr.mxu0 0.0
        %683 = vmatpush1.msra.mxu0 0.0
        %684 = vmatprep.subr.mxu0 0.0
        %685 = vmatpush1.msra.mxu0 0.0
        %686 = vmatprep.subr.mxu0 0.0
        %687 = vmatpush1.msra.mxu0 0.0
        %688 = vmatprep.subr.mxu0 0.0
        %689 = vmatpush1.msra.mxu0 0.0
        %690 = vmatprep.subr.mxu0 0.0
        %691 = vmatpush1.msra.mxu0 0.0
        %692 = vmatprep.subr.mxu0 0.0
        %693 = vmatpush1.msra.mxu0 0.0
        %694 = vmatprep.subr.mxu0 0.0
        %695 = vmatpush1.msra.mxu0 0.0
        %696 = vmatprep.subr.mxu0 0.0
        %697 = vmatpush1.msra.mxu0 0.0
        %698 = vmatprep.subr.mxu0 0.0
        %699 = vmatpush1.msra.mxu0 0.0
        %700 = vmatprep.subr.mxu0 0.0
        %701 = vmatpush1.msra.mxu0 0.0
        %702 = vmatprep.subr.mxu0 0.0
        %703 = vmatpush1.msra.mxu0 0.0
        %704 = vmatprep.subr.mxu0 0.0
        %705 = vmatpush1.msra.mxu0 0.0
        %706 = vmatprep.subr.mxu0 0.0
        %707 = vmatpush1.msra.mxu0 0.0
        %708 = vmatprep.subr.mxu0 0.0
        %709 = vmatpush1.msra.mxu0 0.0
        %710 = vmatprep.subr.mxu0 0.0
        %711 = vmatpush1.msra.mxu0 0.0
        %712 = vmatprep.subr.mxu0 0.0
        %713 = vmatpush1.msra.mxu0 0.0
        %714 = vmatprep.subr.mxu0 0.0
        %715 = vmatpush1.msra.mxu0 0.0
        %716 = vmatprep.subr.mxu0 0.0
        %717 = vmatpush1.msra.mxu0 0.0
        %718 = vmatprep.subr.mxu0 0.0
        %719 = vmatpush1.msra.mxu0 0.0
        %720 = vmatprep.subr.mxu0 0.0
        %721 = vmatpush1.msra.mxu0 0.0
        %722 = vmatprep.subr.mxu0 0.0
        %723 = vmatpush1.msra.mxu0 0.0
        %724 = vmatprep.subr.mxu0 0.0
        %725 = vmatpush1.msra.mxu0 0.0
        %726 = vmatprep.subr.mxu0 0.0
        %727 = vmatpush1.msra.mxu0 0.0
        %728 = vmatprep.subr.mxu0 0.0
        %729 = vmatpush1.msra.mxu0 0.0
        %730 = vmatprep.subr.mxu0 0.0
        %731 = vmatpush1.msra.mxu0 0.0
        %732 = vmatprep.subr.mxu0 0.0
        %733 = vmatpush1.msra.mxu0 0.0
        %734 = vmatprep.subr.mxu0 0.0
        %735 = vmatpush1.msra.mxu0 0.0
        %736 = vmatprep.subr.mxu0 0.0
        %737 = vmatpush1.msra.mxu0 0.0
        %738 = vmatprep.subr.mxu0 0.0
        %739 = vmatpush1.msra.mxu0 0.0
        %740 = vmatprep.mubr.f32.mxu0 0.0
        %741 = vmatmul.mubr.f32.gmra.mrb[0].mxu0 %v674
        %v742 = vpop.f32.mrb[0].mxu0
        %v743 = vadd.f32 0.0, %v742
        %v744 = vpop.f32.mrb[0].mxu0
        %745 = vdwg.mxu0
        %v747 = vrot.slane %v743, 1
        %vm749 = vcmask 1046528
        %v750 = vsel %vm749, %v747, %v747
        %752 = vrot.lane.b32.xlu0 %v750, 9
        %v753 = vpop.permute.xlu0 %752
        %vm755 = vcmask 72704
        %v756 = vsel %vm755, %v743, %v753
        %758 = vrot.lane.b32.xlu0 %v756, 127
        %v759 = vpop.permute.xlu0 %758
        %761 = vrot.lane.b32.xlu0 %v756, 17
        %v762 = vpop.permute.xlu0 %761
        %vm764 = vcmask 138240
        %v765 = vsel %vm764, %v759, %v762
        %v766 = vsel %vm662, %v765, %v756
        %768 = vrot.lane.b32.xlu0 %v766, 126
        %v769 = vpop.permute.xlu0 %768
        %771 = vrot.lane.b32.xlu0 %v766, 16
        %v772 = vpop.permute.xlu0 %771
        %vm774 = vcmask 130048
        %v775 = vsel %vm774, %v769, %v772
        %v776 = vsel %vm665, %v775, %v766
        %778 = vrot.lane.b32.xlu0 %v776, 124
        %v779 = vpop.permute.xlu0 %778
        %781 = vrot.lane.b32.xlu0 %v776, 14
        %v782 = vpop.permute.xlu0 %781
        %vm784 = vcmask 113664
        %v785 = vsel %vm784, %v779, %v782
        %v786 = vsel %vm668, %v785, %v776
        %788 = vrot.lane.b32.xlu0 %v786, 120
        %v789 = vpop.permute.xlu0 %788
        %791 = vrot.lane.b32.xlu0 %v786, 10
        %v792 = vpop.permute.xlu0 %791
        %vm794 = vcmask 80896
        %v795 = vsel %vm794, %v789, %v792
        %v796 = vsel %vm671, %v795, %v786
        %v798 = vsel %vm672, %v647, 0
        %v801 = vsel %vm672, %v559, 0
        %803 = vmatprep.subr.mxu0 0.0
        %804 = vmatpush1.xpose.msra.mxu0 %v801
        %805 = vmatprep.subr.mxu0 0.0
        %806 = vmatpush1.xpose.msra.mxu0 0.0
        %807 = vmatprep.subr.mxu0 0.0
        %808 = vmatpush1.xpose.msra.mxu0 0.0
        %809 = vmatprep.subr.mxu0 0.0
        %810 = vmatpush1.xpose.msra.mxu0 0.0
        %811 = vmatprep.subr.mxu0 0.0
        %812 = vmatpush1.xpose.msra.mxu0 0.0
        %813 = vmatprep.subr.mxu0 0.0
        %814 = vmatpush1.xpose.msra.mxu0 0.0
        %815 = vmatprep.subr.mxu0 0.0
        %816 = vmatpush1.xpose.msra.mxu0 0.0
        %817 = vmatprep.subr.mxu0 0.0
        %818 = vmatpush1.xpose.msra.mxu0 0.0
        %819 = vmatprep.subr.mxu0 0.0
        %820 = vmatpush1.xpose.msra.mxu0 0.0
        %821 = vmatprep.subr.mxu0 0.0
        %822 = vmatpush1.xpose.msra.mxu0 0.0
        %823 = vmatprep.subr.mxu0 0.0
        %824 = vmatpush1.xpose.msra.mxu0 0.0
        %825 = vmatprep.subr.mxu0 0.0
        %826 = vmatpush1.xpose.msra.mxu0 0.0
        %827 = vmatprep.subr.mxu0 0.0
        %828 = vmatpush1.xpose.msra.mxu0 0.0
        %829 = vmatprep.subr.mxu0 0.0
        %830 = vmatpush1.xpose.msra.mxu0 0.0
        %831 = vmatprep.subr.mxu0 0.0
        %832 = vmatpush1.xpose.msra.mxu0 0.0
        %833 = vmatprep.subr.mxu0 0.0
        %834 = vmatpush1.xpose.msra.mxu0 0.0
        %835 = vmatprep.subr.mxu0 0.0
        %836 = vmatpush1.xpose.msra.mxu0 0.0
        %837 = vmatprep.subr.mxu0 0.0
        %838 = vmatpush1.xpose.msra.mxu0 0.0
        %839 = vmatprep.subr.mxu0 0.0
        %840 = vmatpush1.xpose.msra.mxu0 0.0
        %841 = vmatprep.subr.mxu0 0.0
        %842 = vmatpush1.xpose.msra.mxu0 0.0
        %843 = vmatprep.subr.mxu0 0.0
        %844 = vmatpush1.xpose.msra.mxu0 0.0
        %845 = vmatprep.subr.mxu0 0.0
        %846 = vmatpush1.xpose.msra.mxu0 0.0
        %847 = vmatprep.subr.mxu0 0.0
        %848 = vmatpush1.xpose.msra.mxu0 0.0
        %849 = vmatprep.subr.mxu0 0.0
        %850 = vmatpush1.xpose.msra.mxu0 0.0
        %851 = vmatprep.subr.mxu0 0.0
        %852 = vmatpush1.xpose.msra.mxu0 0.0
        %853 = vmatprep.subr.mxu0 0.0
        %854 = vmatpush1.xpose.msra.mxu0 0.0
        %855 = vmatprep.subr.mxu0 0.0
        %856 = vmatpush1.xpose.msra.mxu0 0.0
        %857 = vmatprep.subr.mxu0 0.0
        %858 = vmatpush1.xpose.msra.mxu0 0.0
        %859 = vmatprep.subr.mxu0 0.0
        %860 = vmatpush1.xpose.msra.mxu0 0.0
        %861 = vmatprep.subr.mxu0 0.0
        %862 = vmatpush1.xpose.msra.mxu0 0.0
        %863 = vmatprep.subr.mxu0 0.0
        %864 = vmatpush1.xpose.msra.mxu0 0.0
        %865 = vmatprep.subr.mxu0 0.0
        %866 = vmatpush1.xpose.msra.mxu0 0.0
        %867 = vmatprep.mubr.f32.mxu0 0.0
        %868 = vmatmul.mubr.f32.gmra.mrb[0].mxu0 %v798
        %v869 = vpop.f32.mrb[0].mxu0
        %v870 = vadd.f32 %v796, %v869
        %v871 = vpop.f32.mrb[0].mxu0
        %872 = vdwg.mxu0
        %v873 = vmul.f32 %v870, 0.17677669
        %v874 = vsel %vm672, %v873, -inf
        %875 = vmax.xlane.f32.xlu0 %v874
        %v876 = vpop.xlane.xlu0 %875
        %v877 = vsub.f32 %v873, %v876
        %v878 = vmul.f32 %v877, 1.442695
        %v879 = vpow.pop %v878
        %v880 = vsel %vm672, %v879, 0.0
        %881 = vadd.xlane.f32.xlu0 %v880
        %v882 = vpop.xlane.xlu0 %881
        %v883 = vrcp.pop %v882
        %v885 = vsel %vm672, %v879, 0
        %887 = vmatprep.subr.mxu0 0.0
        %888 = vmatpush1.msra.mxu0 %v639
        %889 = vmatprep.subr.mxu0 0.0
        %890 = vmatpush1.msra.mxu0 0.0
        %891 = vmatprep.subr.mxu0 0.0
        %892 = vmatpush1.msra.mxu0 0.0
        %893 = vmatprep.subr.mxu0 0.0
        %894 = vmatpush1.msra.mxu0 0.0
        %895 = vmatprep.subr.mxu0 0.0
        %896 = vmatpush1.msra.mxu0 0.0
        %897 = vmatprep.subr.mxu0 0.0
        %898 = vmatpush1.msra.mxu0 0.0
        %899 = vmatprep.subr.mxu0 0.0
        %900 = vmatpush1.msra.mxu0 0.0
        %901 = vmatprep.subr.mxu0 0.0
        %902 = vmatpush1.msra.mxu0 0.0
        %903 = vmatprep.subr.mxu0 0.0
        %904 = vmatpush1.msra.mxu0 0.0
        %905 = vmatprep.subr.mxu0 0.0
        %906 = vmatpush1.msra.mxu0 0.0
        %907 = vmatprep.subr.mxu0 0.0
        %908 = vmatpush1.msra.mxu0 0.0
        %909 = vmatprep.subr.mxu0 0.0
        %910 = vmatpush1.msra.mxu0 0.0
        %911 = vmatprep.subr.mxu0 0.0
        %912 = vmatpush1.msra.mxu0 0.0
        %913 = vmatprep.subr.mxu0 0.0
        %914 = vmatpush1.msra.mxu0 0.0
        %915 = vmatprep.subr.mxu0 0.0
        %916 = vmatpush1.msra.mxu0 0.0
        %917 = vmatprep.subr.mxu0 0.0
        %918 = vmatpush1.msra.mxu0 0.0
        %919 = vmatprep.subr.mxu0 0.0
        %920 = vmatpush1.msra.mxu0 0.0
        %921 = vmatprep.subr.mxu0 0.0
        %922 = vmatpush1.msra.mxu0 0.0
        %923 = vmatprep.subr.mxu0 0.0
        %924 = vmatpush1.msra.mxu0 0.0
        %925 = vmatprep.subr.mxu0 0.0
        %926 = vmatpush1.msra.mxu0 0.0
        %927 = vmatprep.subr.mxu0 0.0
        %928 = vmatpush1.msra.mxu0 0.0
        %929 = vmatprep.subr.mxu0 0.0
        %930 = vmatpush1.msra.mxu0 0.0
        %931 = vmatprep.subr.mxu0 0.0
        %932 = vmatpush1.msra.mxu0 0.0
        %933 = vmatprep.subr.mxu0 0.0
        %934 = vmatpush1.msra.mxu0 0.0
        %935 = vmatprep.subr.mxu0 0.0
        %936 = vmatpush1.msra.mxu0 0.0
        %937 = vmatprep.subr.mxu0 0.0
        %938 = vmatpush1.msra.mxu0 0.0
        %939 = vmatprep.subr.mxu0 0.0
        %940 = vmatpush1.msra.mxu0 0.0
        %941 = vmatprep.subr.mxu0 0.0
        %942 = vmatpush1.msra.mxu0 0.0
        %943 = vmatprep.subr.mxu0 0.0
        %944 = vmatpush1.msra.mxu0 0.0
        %945 = vmatprep.subr.mxu0 0.0
        %946 = vmatpush1.msra.mxu0 0.0
        %947 = vmatprep.subr.mxu0 0.0
        %948 = vmatpush1.msra.mxu0 0.0
        %949 = vmatprep.subr.mxu0 0.0
        %950 = vmatpush1.msra.mxu0 0.0
        %951 = vmatprep.mubr.f32.mxu0 0.0
        %952 = vmatmul.mubr.f32.gmra.mrb[0].mxu0 %v885
        %v953 = vpop.f32.mrb[0].mxu0
        %v954 = vadd.f32 0.0, %v953
        %v955 = vpop.f32.mrb[0].mxu0
        %956 = vdwg.mxu0
        %v957 = vmul.f32 %v954, %v883
        %v958 = vld [vmem:[%s7] sm:$0xff]
        %959 = vrot.lane.b32.xlu0 %v653, 120
        %v960 = vpop.permute.xlu0 %959
        %v961 = vsel %vm672, %v960, 0
        %963 = vmatprep.subr.mxu0 0.0
        %964 = vmatpush1.msra.mxu0 %v655
        %965 = vmatprep.subr.mxu0 0.0
        %966 = vmatpush1.msra.mxu0 0.0
        %967 = vmatprep.subr.mxu0 0.0
        %968 = vmatpush1.msra.mxu0 0.0
        %969 = vmatprep.subr.mxu0 0.0
        %970 = vmatpush1.msra.mxu0 0.0
        %971 = vmatprep.subr.mxu0 0.0
        %972 = vmatpush1.msra.mxu0 0.0
        %973 = vmatprep.subr.mxu0 0.0
        %974 = vmatpush1.msra.mxu0 0.0
        %975 = vmatprep.subr.mxu0 0.0
        %976 = vmatpush1.msra.mxu0 0.0
        %977 = vmatprep.subr.mxu0 0.0
        %978 = vmatpush1.msra.mxu0 0.0
        %979 = vmatprep.subr.mxu0 0.0
        %980 = vmatpush1.msra.mxu0 0.0
        %981 = vmatprep.subr.mxu0 0.0
        %982 = vmatpush1.msra.mxu0 0.0
        %983 = vmatprep.subr.mxu0 0.0
        %984 = vmatpush1.msra.mxu0 0.0
        %985 = vmatprep.subr.mxu0 0.0
        %986 = vmatpush1.msra.mxu0 0.0
        %987 = vmatprep.subr.mxu0 0.0
        %988 = vmatpush1.msra.mxu0 0.0
        %989 = vmatprep.subr.mxu0 0.0
        %990 = vmatpush1.msra.mxu0 0.0
        %991 = vmatprep.subr.mxu0 0.0
        %992 = vmatpush1.msra.mxu0 0.0
        %993 = vmatprep.subr.mxu0 0.0
        %994 = vmatpush1.msra.mxu0 0.0
        %995 = vmatprep.subr.mxu0 0.0
        %996 = vmatpush1.msra.mxu0 0.0
        %997 = vmatprep.subr.mxu0 0.0
        %998 = vmatpush1.msra.mxu0 0.0
        %999 = vmatprep.subr.mxu0 0.0
        %1000 = vmatpush1.msra.mxu0 0.0
        %1001 = vmatprep.subr.mxu0 0.0
        %1002 = vmatpush1.msra.mxu0 0.0
        %1003 = vmatprep.subr.mxu0 0.0
        %1004 = vmatpush1.msra.mxu0 0.0
        %1005 = vmatprep.subr.mxu0 0.0
        %1006 = vmatpush1.msra.mxu0 0.0
        %1007 = vmatprep.subr.mxu0 0.0
        %1008 = vmatpush1.msra.mxu0 0.0
        %1009 = vmatprep.subr.mxu0 0.0
        %1010 = vmatpush1.msra.mxu0 0.0
        %1011 = vmatprep.subr.mxu0 0.0
        %1012 = vmatpush1.msra.mxu0 0.0
        %1013 = vmatprep.subr.mxu0 0.0
        %1014 = vmatpush1.msra.mxu0 0.0
        %1015 = vmatprep.subr.mxu0 0.0
        %1016 = vmatpush1.msra.mxu0 0.0
        %1017 = vmatprep.subr.mxu0 0.0
        %1018 = vmatpush1.msra.mxu0 0.0
        %1019 = vmatprep.subr.mxu0 0.0
        %1020 = vmatpush1.msra.mxu0 0.0
        %1021 = vmatprep.subr.mxu0 0.0
        %1022 = vmatpush1.msra.mxu0 0.0
        %1023 = vmatprep.subr.mxu0 0.0
        %1024 = vmatpush1.msra.mxu0 0.0
        %1025 = vmatprep.subr.mxu0 0.0
        %1026 = vmatpush1.msra.mxu0 0.0
        %1027 = vmatprep.mubr.f32.mxu0 0.0
        %1028 = vmatmul.mubr.f32.gmra.mrb[0].mxu0 %v961
        %v1029 = vpop.f32.mrb[0].mxu0
        %v1030 = vadd.f32 0.0, %v1029
        %v1031 = vpop.f32.mrb[0].mxu0
        %1032 = vdwg.mxu0
        %v1034 = vrot.slane %v1030, 1
        %v1036 = vsel %vm749, %v1034, %v1034
        %1038 = vrot.lane.b32.xlu0 %v1036, 9
        %v1039 = vpop.permute.xlu0 %1038
        %v1041 = vsel %vm755, %v1030, %v1039
        %1043 = vrot.lane.b32.xlu0 %v1041, 127
        %v1044 = vpop.permute.xlu0 %1043
        %1046 = vrot.lane.b32.xlu0 %v1041, 17
        %v1047 = vpop.permute.xlu0 %1046
        %v1049 = vsel %vm764, %v1044, %v1047
        %v1050 = vsel %vm662, %v1049, %v1041
        %1052 = vrot.lane.b32.xlu0 %v1050, 126
        %v1053 = vpop.permute.xlu0 %1052
        %1055 = vrot.lane.b32.xlu0 %v1050, 16
        %v1056 = vpop.permute.xlu0 %1055
        %v1058 = vsel %vm774, %v1053, %v1056
        %v1059 = vsel %vm665, %v1058, %v1050
        %1061 = vrot.lane.b32.xlu0 %v1059, 124
        %v1062 = vpop.permute.xlu0 %1061
        %1064 = vrot.lane.b32.xlu0 %v1059, 14
        %v1065 = vpop.permute.xlu0 %1064
        %v1067 = vsel %vm784, %v1062, %v1065
        %v1068 = vsel %vm668, %v1067, %v1059
        %1070 = vrot.lane.b32.xlu0 %v1068, 120
        %v1071 = vpop.permute.xlu0 %1070
        %1073 = vrot.lane.b32.xlu0 %v1068, 10
        %v1074 = vpop.permute.xlu0 %1073
        %v1076 = vsel %vm794, %v1071, %v1074
        %v1077 = vsel %vm671, %v1076, %v1068
        %1078 = vrot.lane.b32.xlu0 %v647, 120
        %v1079 = vpop.permute.xlu0 %1078
        %1080 = vrot.lane.b32.xlu0 %v559, 120
        %v1081 = vpop.permute.xlu0 %1080
        %v1082 = vsel %vm672, %v1079, 0
        %v1084 = vsel %vm672, %v1081, 0
        %1086 = vmatprep.subr.mxu0 0.0
        %1087 = vmatpush1.xpose.msra.mxu0 %v1084
        %1088 = vmatprep.subr.mxu0 0.0
        %1089 = vmatpush1.xpose.msra.mxu0 0.0
        %1090 = vmatprep.subr.mxu0 0.0
        %1091 = vmatpush1.xpose.msra.mxu0 0.0
        %1092 = vmatprep.subr.mxu0 0.0
        %1093 = vmatpush1.xpose.msra.mxu0 0.0
        %1094 = vmatprep.subr.mxu0 0.0
        %1095 = vmatpush1.xpose.msra.mxu0 0.0
        %1096 = vmatprep.subr.mxu0 0.0
        %1097 = vmatpush1.xpose.msra.mxu0 0.0
        %1098 = vmatprep.subr.mxu0 0.0
        %1099 = vmatpush1.xpose.msra.mxu0 0.0
        %1100 = vmatprep.subr.mxu0 0.0
        %1101 = vmatpush1.xpose.msra.mxu0 0.0
        %1102 = vmatprep.subr.mxu0 0.0
        %1103 = vmatpush1.xpose.msra.mxu0 0.0
        %1104 = vmatprep.subr.mxu0 0.0
        %1105 = vmatpush1.xpose.msra.mxu0 0.0
        %1106 = vmatprep.subr.mxu0 0.0
        %1107 = vmatpush1.xpose.msra.mxu0 0.0
        %1108 = vmatprep.subr.mxu0 0.0
        %1109 = vmatpush1.xpose.msra.mxu0 0.0
        %1110 = vmatprep.subr.mxu0 0.0
        %1111 = vmatpush1.xpose.msra.mxu0 0.0
        %1112 = vmatprep.subr.mxu0 0.0
        %1113 = vmatpush1.xpose.msra.mxu0 0.0
        %1114 = vmatprep.subr.mxu0 0.0
        %1115 = vmatpush1.xpose.msra.mxu0 0.0
        %1116 = vmatprep.subr.mxu0 0.0
        %1117 = vmatpush1.xpose.msra.mxu0 0.0
        %1118 = vmatprep.subr.mxu0 0.0
        %1119 = vmatpush1.xpose.msra.mxu0 0.0
        %1120 = vmatprep.subr.mxu0 0.0
        %1121 = vmatpush1.xpose.msra.mxu0 0.0
        %1122 = vmatprep.subr.mxu0 0.0
        %1123 = vmatpush1.xpose.msra.mxu0 0.0
        %1124 = vmatprep.subr.mxu0 0.0
        %1125 = vmatpush1.xpose.msra.mxu0 0.0
        %1126 = vmatprep.subr.mxu0 0.0
        %1127 = vmatpush1.xpose.msra.mxu0 0.0
        %1128 = vmatprep.subr.mxu0 0.0
        %1129 = vmatpush1.xpose.msra.mxu0 0.0
        %1130 = vmatprep.subr.mxu0 0.0
        %1131 = vmatpush1.xpose.msra.mxu0 0.0
        %1132 = vmatprep.subr.mxu0 0.0
        %1133 = vmatpush1.xpose.msra.mxu0 0.0
        %1134 = vmatprep.subr.mxu0 0.0
        %1135 = vmatpush1.xpose.msra.mxu0 0.0
        %1136 = vmatprep.subr.mxu0 0.0
        %1137 = vmatpush1.xpose.msra.mxu0 0.0
        %1138 = vmatprep.subr.mxu0 0.0
        %1139 = vmatpush1.xpose.msra.mxu0 0.0
        %1140 = vmatprep.subr.mxu0 0.0
        %1141 = vmatpush1.xpose.msra.mxu0 0.0
        %1142 = vmatprep.subr.mxu0 0.0
        %1143 = vmatpush1.xpose.msra.mxu0 0.0
        %1144 = vmatprep.subr.mxu0 0.0
        %1145 = vmatpush1.xpose.msra.mxu0 0.0
        %1146 = vmatprep.subr.mxu0 0.0
        %1147 = vmatpush1.xpose.msra.mxu0 0.0
        %1148 = vmatprep.subr.mxu0 0.0
        %1149 = vmatpush1.xpose.msra.mxu0 0.0
        %1150 = vmatprep.mubr.f32.mxu0 0.0
        %1151 = vmatmul.mubr.f32.gmra.mrb[0].mxu0 %v1082
        %v1152 = vpop.f32.mrb[0].mxu0
        %v1153 = vadd.f32 %v1077, %v1152
        %v1154 = vpop.f32.mrb[0].mxu0
        %1155 = vdwg.mxu0
        %v1156 = vmul.f32 %v1153, 0.17677669
        %v1157 = vsel %vm672, %v1156, -inf
        %1158 = vmax.xlane.f32.xlu0 %v1157
        %v1159 = vpop.xlane.xlu0 %1158
        %v1160 = vsub.f32 %v1156, %v1159
        %v1161 = vmul.f32 %v1160, 1.442695
        %v1162 = vpow.pop %v1161
        %v1163 = vsel %vm672, %v1162, 0.0
        %1164 = vadd.xlane.f32.xlu0 %v1163
        %v1165 = vpop.xlane.xlu0 %1164
        %v1166 = vrcp.pop %v1165
        %1168 = vrot.lane.b32.xlu0 %v639, 120
        %v1169 = vpop.permute.xlu0 %1168
        %v1172 = vsel %vm672, %v1162, 0
        %1174 = vmatprep.subr.mxu0 0.0
        %1175 = vmatpush1.msra.mxu0 %v1169
        %1176 = vmatprep.subr.mxu0 0.0
        %1177 = vmatpush1.msra.mxu0 0.0
        %1178 = vmatprep.subr.mxu0 0.0
        %1179 = vmatpush1.msra.mxu0 0.0
        %1180 = vmatprep.subr.mxu0 0.0
        %1181 = vmatpush1.msra.mxu0 0.0
        %1182 = vmatprep.subr.mxu0 0.0
        %1183 = vmatpush1.msra.mxu0 0.0
        %1184 = vmatprep.subr.mxu0 0.0
        %1185 = vmatpush1.msra.mxu0 0.0
        %1186 = vmatprep.subr.mxu0 0.0
        %1187 = vmatpush1.msra.mxu0 0.0
        %1188 = vmatprep.subr.mxu0 0.0
        %1189 = vmatpush1.msra.mxu0 0.0
        %1190 = vmatprep.subr.mxu0 0.0
        %1191 = vmatpush1.msra.mxu0 0.0
        %1192 = vmatprep.subr.mxu0 0.0
        %1193 = vmatpush1.msra.mxu0 0.0
        %1194 = vmatprep.subr.mxu0 0.0
        %1195 = vmatpush1.msra.mxu0 0.0
        %1196 = vmatprep.subr.mxu0 0.0
        %1197 = vmatpush1.msra.mxu0 0.0
        %1198 = vmatprep.subr.mxu0 0.0
        %1199 = vmatpush1.msra.mxu0 0.0
        %1200 = vmatprep.subr.mxu0 0.0
        %1201 = vmatpush1.msra.mxu0 0.0
        %1202 = vmatprep.subr.mxu0 0.0
        %1203 = vmatpush1.msra.mxu0 0.0
        %1204 = vmatprep.subr.mxu0 0.0
        %1205 = vmatpush1.msra.mxu0 0.0
        %1206 = vmatprep.subr.mxu0 0.0
        %1207 = vmatpush1.msra.mxu0 0.0
        %1208 = vmatprep.subr.mxu0 0.0
        %1209 = vmatpush1.msra.mxu0 0.0
        %1210 = vmatprep.subr.mxu0 0.0
        %1211 = vmatpush1.msra.mxu0 0.0
        %1212 = vmatprep.subr.mxu0 0.0
        %1213 = vmatpush1.msra.mxu0 0.0
        %1214 = vmatprep.subr.mxu0 0.0
        %1215 = vmatpush1.msra.mxu0 0.0
        %1216 = vmatprep.subr.mxu0 0.0
        %1217 = vmatpush1.msra.mxu0 0.0
        %1218 = vmatprep.subr.mxu0 0.0
        %1219 = vmatpush1.msra.mxu0 0.0
        %1220 = vmatprep.subr.mxu0 0.0
        %1221 = vmatpush1.msra.mxu0 0.0
        %1222 = vmatprep.subr.mxu0 0.0
        %1223 = vmatpush1.msra.mxu0 0.0
        %1224 = vmatprep.subr.mxu0 0.0
        %1225 = vmatpush1.msra.mxu0 0.0
        %1226 = vmatprep.subr.mxu0 0.0
        %1227 = vmatpush1.msra.mxu0 0.0
        %1228 = vmatprep.subr.mxu0 0.0
        %1229 = vmatpush1.msra.mxu0 0.0
        %1230 = vmatprep.subr.mxu0 0.0
        %1231 = vmatpush1.msra.mxu0 0.0
        %1232 = vmatprep.subr.mxu0 0.0
        %1233 = vmatpush1.msra.mxu0 0.0
        %1234 = vmatprep.subr.mxu0 0.0
        %1235 = vmatpush1.msra.mxu0 0.0
        %1236 = vmatprep.subr.mxu0 0.0
        %1237 = vmatpush1.msra.mxu0 0.0
        %1238 = vmatprep.mubr.f32.mxu0 0.0
        %1239 = vmatmul.mubr.f32.gmra.mrb[0].mxu0 %v1172
        %v1240 = vpop.f32.mrb[0].mxu0
        %v1241 = vadd.f32 0.0, %v1240
        %v1242 = vpop.f32.mrb[0].mxu0
        %1243 = vdwg.mxu0
        %v1244 = vmul.f32 %v1241, %v1166
        %v1245 = vld [vmem:[%s7 + $0x8] sm:$0xff]
        %v1247 = vsel %vm672, %v1244, 0
        %1249 = vmatprep.subr.mxu0 0.0
        %1250 = vmatpush1.msra.mxu0 %v1245
        %1251 = vmatprep.subr.mxu0 0.0
        %1252 = vmatpush1.msra.mxu0 0.0
        %1253 = vmatprep.subr.mxu0 0.0
        %1254 = vmatpush1.msra.mxu0 0.0
        %1255 = vmatprep.subr.mxu0 0.0
        %1256 = vmatpush1.msra.mxu0 0.0
        %1257 = vmatprep.subr.mxu0 0.0
        %1258 = vmatpush1.msra.mxu0 0.0
        %1259 = vmatprep.subr.mxu0 0.0
        %1260 = vmatpush1.msra.mxu0 0.0
        %1261 = vmatprep.subr.mxu0 0.0
        %1262 = vmatpush1.msra.mxu0 0.0
        %1263 = vmatprep.subr.mxu0 0.0
        %1264 = vmatpush1.msra.mxu0 0.0
        %1265 = vmatprep.subr.mxu0 0.0
        %1266 = vmatpush1.msra.mxu0 0.0
        %1267 = vmatprep.subr.mxu0 0.0
        %1268 = vmatpush1.msra.mxu0 0.0
        %1269 = vmatprep.subr.mxu0 0.0
        %1270 = vmatpush1.msra.mxu0 0.0
        %1271 = vmatprep.subr.mxu0 0.0
        %1272 = vmatpush1.msra.mxu0 0.0
        %1273 = vmatprep.subr.mxu0 0.0
        %1274 = vmatpush1.msra.mxu0 0.0
        %1275 = vmatprep.subr.mxu0 0.0
        %1276 = vmatpush1.msra.mxu0 0.0
        %1277 = vmatprep.subr.mxu0 0.0
        %1278 = vmatpush1.msra.mxu0 0.0
        %1279 = vmatprep.subr.mxu0 0.0
        %1280 = vmatpush1.msra.mxu0 0.0
        %1281 = vmatprep.subr.mxu0 0.0
        %1282 = vmatpush1.msra.mxu0 0.0
        %1283 = vmatprep.subr.mxu0 0.0
        %1284 = vmatpush1.msra.mxu0 0.0
        %1285 = vmatprep.subr.mxu0 0.0
        %1286 = vmatpush1.msra.mxu0 0.0
        %1287 = vmatprep.subr.mxu0 0.0
        %1288 = vmatpush1.msra.mxu0 0.0
        %1289 = vmatprep.subr.mxu0 0.0
        %1290 = vmatpush1.msra.mxu0 0.0
        %1291 = vmatprep.subr.mxu0 0.0
        %1292 = vmatpush1.msra.mxu0 0.0
        %1293 = vmatprep.subr.mxu0 0.0
        %1294 = vmatpush1.msra.mxu0 0.0
        %1295 = vmatprep.subr.mxu0 0.0
        %1296 = vmatpush1.msra.mxu0 0.0
        %1297 = vmatprep.subr.mxu0 0.0
        %1298 = vmatpush1.msra.mxu0 0.0
        %1299 = vmatprep.subr.mxu0 0.0
        %1300 = vmatpush1.msra.mxu0 0.0
        %1301 = vmatprep.subr.mxu0 0.0
        %1302 = vmatpush1.msra.mxu0 0.0
        %1303 = vmatprep.subr.mxu0 0.0
        %1304 = vmatpush1.msra.mxu0 0.0
        %1305 = vmatprep.subr.mxu0 0.0
        %1306 = vmatpush1.msra.mxu0 0.0
        %1307 = vmatprep.subr.mxu0 0.0
        %1308 = vmatpush1.msra.mxu0 0.0
        %1309 = vmatprep.subr.mxu0 0.0
        %1310 = vmatpush1.msra.mxu0 0.0
        %1311 = vmatprep.subr.mxu0 0.0
        %1312 = vmatpush1.msra.mxu0 0.0
        %1313 = vmatprep.mubr.f32.mxu0 0.0
        %1314 = vmatmul.mubr.f32.gmra.mrb[0].mxu0 %v1247
        %v1315 = vpop.f32.mrb[0].mxu0
        %v1316 = vadd.f32 0.0, %v1315
        %v1317 = vpop.f32.mrb[0].mxu0
        %1318 = vdwg.mxu0
        %v1320 = vsel %vm672, %v957, 0
        %1322 = vmatprep.subr.mxu0 0.0
        %1323 = vmatpush1.msra.mxu0 %v958
        %1324 = vmatprep.subr.mxu0 0.0
        %1325 = vmatpush1.msra.mxu0 0.0
        %1326 = vmatprep.subr.mxu0 0.0
        %1327 = vmatpush1.msra.mxu0 0.0
        %1328 = vmatprep.subr.mxu0 0.0
        %1329 = vmatpush1.msra.mxu0 0.0
        %1330 = vmatprep.subr.mxu0 0.0
        %1331 = vmatpush1.msra.mxu0 0.0
        %1332 = vmatprep.subr.mxu0 0.0
        %1333 = vmatpush1.msra.mxu0 0.0
        %1334 = vmatprep.subr.mxu0 0.0
        %1335 = vmatpush1.msra.mxu0 0.0
        %1336 = vmatprep.subr.mxu0 0.0
        %1337 = vmatpush1.msra.mxu0 0.0
        %1338 = vmatprep.subr.mxu0 0.0
        %1339 = vmatpush1.msra.mxu0 0.0
        %1340 = vmatprep.subr.mxu0 0.0
        %1341 = vmatpush1.msra.mxu0 0.0
        %1342 = vmatprep.subr.mxu0 0.0
        %1343 = vmatpush1.msra.mxu0 0.0
        %1344 = vmatprep.subr.mxu0 0.0
        %1345 = vmatpush1.msra.mxu0 0.0
        %1346 = vmatprep.subr.mxu0 0.0
        %1347 = vmatpush1.msra.mxu0 0.0
        %1348 = vmatprep.subr.mxu0 0.0
        %1349 = vmatpush1.msra.mxu0 0.0
        %1350 = vmatprep.subr.mxu0 0.0
        %1351 = vmatpush1.msra.mxu0 0.0
        %1352 = vmatprep.subr.mxu0 0.0
        %1353 = vmatpush1.msra.mxu0 0.0
        %1354 = vmatprep.subr.mxu0 0.0
        %1355 = vmatpush1.msra.mxu0 0.0
        %1356 = vmatprep.subr.mxu0 0.0
        %1357 = vmatpush1.msra.mxu0 0.0
        %1358 = vmatprep.subr.mxu0 0.0
        %1359 = vmatpush1.msra.mxu0 0.0
        %1360 = vmatprep.subr.mxu0 0.0
        %1361 = vmatpush1.msra.mxu0 0.0
        %1362 = vmatprep.subr.mxu0 0.0
        %1363 = vmatpush1.msra.mxu0 0.0
        %1364 = vmatprep.subr.mxu0 0.0
        %1365 = vmatpush1.msra.mxu0 0.0
        %1366 = vmatprep.subr.mxu0 0.0
        %1367 = vmatpush1.msra.mxu0 0.0
        %1368 = vmatprep.subr.mxu0 0.0
        %1369 = vmatpush1.msra.mxu0 0.0
        %1370 = vmatprep.subr.mxu0 0.0
        %1371 = vmatpush1.msra.mxu0 0.0
        %1372 = vmatprep.subr.mxu0 0.0
        %1373 = vmatpush1.msra.mxu0 0.0
        %1374 = vmatprep.subr.mxu0 0.0
        %1375 = vmatpush1.msra.mxu0 0.0
        %1376 = vmatprep.subr.mxu0 0.0
        %1377 = vmatpush1.msra.mxu0 0.0
        %1378 = vmatprep.subr.mxu0 0.0
        %1379 = vmatpush1.msra.mxu0 0.0
        %1380 = vmatprep.subr.mxu0 0.0
        %1381 = vmatpush1.msra.mxu0 0.0
        %1382 = vmatprep.subr.mxu0 0.0
        %1383 = vmatpush1.msra.mxu0 0.0
        %1384 = vmatprep.subr.mxu0 0.0
        %1385 = vmatpush1.msra.mxu0 0.0
        %1386 = vmatprep.mubr.f32.mxu0 0.0
        %1387 = vmatmul.mubr.f32.gmra.mrb[0].mxu0 %v1320
        %v1388 = vpop.f32.mrb[0].mxu0
        %v1389 = vadd.f32 %v1316, %v1388
        %v1390 = vpop.f32.mrb[0].mxu0
        %1391 = vdwg.mxu0
        %1392 = vrot.lane.b32.xlu0 %v653, 112
        %v1393 = vpop.permute.xlu0 %1392
        %v1394 = vsel %vm672, %v1393, 0
        %1396 = vmatprep.subr.mxu0 0.0
        %1397 = vmatpush1.msra.mxu0 %v656
        %1398 = vmatprep.subr.mxu0 0.0
        %1399 = vmatpush1.msra.mxu0 0.0
        %1400 = vmatprep.subr.mxu0 0.0
        %1401 = vmatpush1.msra.mxu0 0.0
        %1402 = vmatprep.subr.mxu0 0.0
        %1403 = vmatpush1.msra.mxu0 0.0
        %1404 = vmatprep.subr.mxu0 0.0
        %1405 = vmatpush1.msra.mxu0 0.0
        %1406 = vmatprep.subr.mxu0 0.0
        %1407 = vmatpush1.msra.mxu0 0.0
        %1408 = vmatprep.subr.mxu0 0.0
        %1409 = vmatpush1.msra.mxu0 0.0
        %1410 = vmatprep.subr.mxu0 0.0
        %1411 = vmatpush1.msra.mxu0 0.0
        %1412 = vmatprep.subr.mxu0 0.0
        %1413 = vmatpush1.msra.mxu0 0.0
        %1414 = vmatprep.subr.mxu0 0.0
        %1415 = vmatpush1.msra.mxu0 0.0
        %1416 = vmatprep.subr.mxu0 0.0
        %1417 = vmatpush1.msra.mxu0 0.0
        %1418 = vmatprep.subr.mxu0 0.0
        %1419 = vmatpush1.msra.mxu0 0.0
        %1420 = vmatprep.subr.mxu0 0.0
        %1421 = vmatpush1.msra.mxu0 0.0
        %1422 = vmatprep.subr.mxu0 0.0
        %1423 = vmatpush1.msra.mxu0 0.0
        %1424 = vmatprep.subr.mxu0 0.0
        %1425 = vmatpush1.msra.mxu0 0.0
        %1426 = vmatprep.subr.mxu0 0.0
        %1427 = vmatpush1.msra.mxu0 0.0
        %1428 = vmatprep.subr.mxu0 0.0
        %1429 = vmatpush1.msra.mxu0 0.0
        %1430 = vmatprep.subr.mxu0 0.0
        %1431 = vmatpush1.msra.mxu0 0.0
        %1432 = vmatprep.subr.mxu0 0.0
        %1433 = vmatpush1.msra.mxu0 0.0
        %1434 = vmatprep.subr.mxu0 0.0
        %1435 = vmatpush1.msra.mxu0 0.0
        %1436 = vmatprep.subr.mxu0 0.0
        %1437 = vmatpush1.msra.mxu0 0.0
        %1438 = vmatprep.subr.mxu0 0.0
        %1439 = vmatpush1.msra.mxu0 0.0
        %1440 = vmatprep.subr.mxu0 0.0
        %1441 = vmatpush1.msra.mxu0 0.0
        %1442 = vmatprep.subr.mxu0 0.0
        %1443 = vmatpush1.msra.mxu0 0.0
        %1444 = vmatprep.subr.mxu0 0.0
        %1445 = vmatpush1.msra.mxu0 0.0
        %1446 = vmatprep.subr.mxu0 0.0
        %1447 = vmatpush1.msra.mxu0 0.0
        %1448 = vmatprep.subr.mxu0 0.0
        %1449 = vmatpush1.msra.mxu0 0.0
        %1450 = vmatprep.subr.mxu0 0.0
        %1451 = vmatpush1.msra.mxu0 0.0
        %1452 = vmatprep.subr.mxu0 0.0
        %1453 = vmatpush1.msra.mxu0 0.0
        %1454 = vmatprep.subr.mxu0 0.0
        %1455 = vmatpush1.msra.mxu0 0.0
        %1456 = vmatprep.subr.mxu0 0.0
        %1457 = vmatpush1.msra.mxu0 0.0
        %1458 = vmatprep.subr.mxu0 0.0
        %1459 = vmatpush1.msra.mxu0 0.0
        %1460 = vmatprep.mubr.f32.mxu0 0.0
        %1461 = vmatmul.mubr.f32.gmra.mrb[0].mxu0 %v1394
        %v1462 = vpop.f32.mrb[0].mxu0
        %v1463 = vadd.f32 0.0, %v1462
        %v1464 = vpop.f32.mrb[0].mxu0
        %1465 = vdwg.mxu0
        %v1467 = vrot.slane %v1463, 1
        %v1469 = vsel %vm749, %v1467, %v1467
        %1471 = vrot.lane.b32.xlu0 %v1469, 9
        %v1472 = vpop.permute.xlu0 %1471
        %v1474 = vsel %vm755, %v1463, %v1472
        %1476 = vrot.lane.b32.xlu0 %v1474, 127
        %v1477 = vpop.permute.xlu0 %1476
        %1479 = vrot.lane.b32.xlu0 %v1474, 17
        %v1480 = vpop.permute.xlu0 %1479
        %v1482 = vsel %vm764, %v1477, %v1480
        %v1483 = vsel %vm662, %v1482, %v1474
        %1485 = vrot.lane.b32.xlu0 %v1483, 126
        %v1486 = vpop.permute.xlu0 %1485
        %1488 = vrot.lane.b32.xlu0 %v1483, 16
        %v1489 = vpop.permute.xlu0 %1488
        %v1491 = vsel %vm774, %v1486, %v1489
        %v1492 = vsel %vm665, %v1491, %v1483
        %1494 = vrot.lane.b32.xlu0 %v1492, 124
        %v1495 = vpop.permute.xlu0 %1494
        %1497 = vrot.lane.b32.xlu0 %v1492, 14
        %v1498 = vpop.permute.xlu0 %1497
        %v1500 = vsel %vm784, %v1495, %v1498
        %v1501 = vsel %vm668, %v1500, %v1492
        %1503 = vrot.lane.b32.xlu0 %v1501, 120
        %v1504 = vpop.permute.xlu0 %1503
        %1506 = vrot.lane.b32.xlu0 %v1501, 10
        %v1507 = vpop.permute.xlu0 %1506
        %v1509 = vsel %vm794, %v1504, %v1507
        %v1510 = vsel %vm671, %v1509, %v1501
        %1511 = vrot.lane.b32.xlu0 %v647, 112
        %v1512 = vpop.permute.xlu0 %1511
        %1513 = vrot.lane.b32.xlu0 %v559, 112
        %v1514 = vpop.permute.xlu0 %1513
        %v1515 = vsel %vm672, %v1512, 0
        %v1517 = vsel %vm672, %v1514, 0
        %1519 = vmatprep.subr.mxu0 0.0
        %1520 = vmatpush1.xpose.msra.mxu0 %v1517
        %1521 = vmatprep.subr.mxu0 0.0
        %1522 = vmatpush1.xpose.msra.mxu0 0.0
        %1523 = vmatprep.subr.mxu0 0.0
        %1524 = vmatpush1.xpose.msra.mxu0 0.0
        %1525 = vmatprep.subr.mxu0 0.0
        %1526 = vmatpush1.xpose.msra.mxu0 0.0
        %1527 = vmatprep.subr.mxu0 0.0
        %1528 = vmatpush1.xpose.msra.mxu0 0.0
        %1529 = vmatprep.subr.mxu0 0.0
        %1530 = vmatpush1.xpose.msra.mxu0 0.0
        %1531 = vmatprep.subr.mxu0 0.0
        %1532 = vmatpush1.xpose.msra.mxu0 0.0
        %1533 = vmatprep.subr.mxu0 0.0
        %1534 = vmatpush1.xpose.msra.mxu0 0.0
        %1535 = vmatprep.subr.mxu0 0.0
        %1536 = vmatpush1.xpose.msra.mxu0 0.0
        %1537 = vmatprep.subr.mxu0 0.0
        %1538 = vmatpush1.xpose.msra.mxu0 0.0
        %1539 = vmatprep.subr.mxu0 0.0
        %1540 = vmatpush1.xpose.msra.mxu0 0.0
        %1541 = vmatprep.subr.mxu0 0.0
        %1542 = vmatpush1.xpose.msra.mxu0 0.0
        %1543 = vmatprep.subr.mxu0 0.0
        %1544 = vmatpush1.xpose.msra.mxu0 0.0
        %1545 = vmatprep.subr.mxu0 0.0
        %1546 = vmatpush1.xpose.msra.mxu0 0.0
        %1547 = vmatprep.subr.mxu0 0.0
        %1548 = vmatpush1.xpose.msra.mxu0 0.0
        %1549 = vmatprep.subr.mxu0 0.0
        %1550 = vmatpush1.xpose.msra.mxu0 0.0
        %1551 = vmatprep.subr.mxu0 0.0
        %1552 = vmatpush1.xpose.msra.mxu0 0.0
        %1553 = vmatprep.subr.mxu0 0.0
        %1554 = vmatpush1.xpose.msra.mxu0 0.0
        %1555 = vmatprep.subr.mxu0 0.0
        %1556 = vmatpush1.xpose.msra.mxu0 0.0
        %1557 = vmatprep.subr.mxu0 0.0
        %1558 = vmatpush1.xpose.msra.mxu0 0.0
        %1559 = vmatprep.subr.mxu0 0.0
        %1560 = vmatpush1.xpose.msra.mxu0 0.0
        %1561 = vmatprep.subr.mxu0 0.0
        %1562 = vmatpush1.xpose.msra.mxu0 0.0
        %1563 = vmatprep.subr.mxu0 0.0
        %1564 = vmatpush1.xpose.msra.mxu0 0.0
        %1565 = vmatprep.subr.mxu0 0.0
        %1566 = vmatpush1.xpose.msra.mxu0 0.0
        %1567 = vmatprep.subr.mxu0 0.0
        %1568 = vmatpush1.xpose.msra.mxu0 0.0
        %1569 = vmatprep.subr.mxu0 0.0
        %1570 = vmatpush1.xpose.msra.mxu0 0.0
        %1571 = vmatprep.subr.mxu0 0.0
        %1572 = vmatpush1.xpose.msra.mxu0 0.0
        %1573 = vmatprep.subr.mxu0 0.0
        %1574 = vmatpush1.xpose.msra.mxu0 0.0
        %1575 = vmatprep.subr.mxu0 0.0
        %1576 = vmatpush1.xpose.msra.mxu0 0.0
        %1577 = vmatprep.subr.mxu0 0.0
        %1578 = vmatpush1.xpose.msra.mxu0 0.0
        %1579 = vmatprep.subr.mxu0 0.0
        %1580 = vmatpush1.xpose.msra.mxu0 0.0
        %1581 = vmatprep.subr.mxu0 0.0
        %1582 = vmatpush1.xpose.msra.mxu0 0.0
        %1583 = vmatprep.mubr.f32.mxu0 0.0
        %1584 = vmatmul.mubr.f32.gmra.mrb[0].mxu0 %v1515
        %v1585 = vpop.f32.mrb[0].mxu0
        %v1586 = vadd.f32 %v1510, %v1585
        %v1587 = vpop.f32.mrb[0].mxu0
        %1588 = vdwg.mxu0
        %v1589 = vmul.f32 %v1586, 0.17677669
        %v1590 = vsel %vm672, %v1589, -inf
        %1591 = vmax.xlane.f32.xlu0 %v1590
        %v1592 = vpop.xlane.xlu0 %1591
        %v1593 = vsub.f32 %v1589, %v1592
        %v1594 = vmul.f32 %v1593, 1.442695
        %v1595 = vpow.pop %v1594
        %v1596 = vsel %vm672, %v1595, 0.0
        %1597 = vadd.xlane.f32.xlu0 %v1596
        %v1598 = vpop.xlane.xlu0 %1597
        %v1599 = vrcp.pop %v1598
        %1600 = vrot.lane.b32.xlu0 %v639, 112
        %v1601 = vpop.permute.xlu0 %1600
        %v1604 = vsel %vm672, %v1595, 0
        %1606 = vmatprep.subr.mxu0 0.0
        %1607 = vmatpush1.msra.mxu0 %v1601
        %1608 = vmatprep.subr.mxu0 0.0
        %1609 = vmatpush1.msra.mxu0 0.0
        %1610 = vmatprep.subr.mxu0 0.0
        %1611 = vmatpush1.msra.mxu0 0.0
        %1612 = vmatprep.subr.mxu0 0.0
        %1613 = vmatpush1.msra.mxu0 0.0
        %1614 = vmatprep.subr.mxu0 0.0
        %1615 = vmatpush1.msra.mxu0 0.0
        %1616 = vmatprep.subr.mxu0 0.0
        %1617 = vmatpush1.msra.mxu0 0.0
        %1618 = vmatprep.subr.mxu0 0.0
        %1619 = vmatpush1.msra.mxu0 0.0
        %1620 = vmatprep.subr.mxu0 0.0
        %1621 = vmatpush1.msra.mxu0 0.0
        %1622 = vmatprep.subr.mxu0 0.0
        %1623 = vmatpush1.msra.mxu0 0.0
        %1624 = vmatprep.subr.mxu0 0.0
        %1625 = vmatpush1.msra.mxu0 0.0
        %1626 = vmatprep.subr.mxu0 0.0
        %1627 = vmatpush1.msra.mxu0 0.0
        %1628 = vmatprep.subr.mxu0 0.0
        %1629 = vmatpush1.msra.mxu0 0.0
        %1630 = vmatprep.subr.mxu0 0.0
        %1631 = vmatpush1.msra.mxu0 0.0
        %1632 = vmatprep.subr.mxu0 0.0
        %1633 = vmatpush1.msra.mxu0 0.0
        %1634 = vmatprep.subr.mxu0 0.0
        %1635 = vmatpush1.msra.mxu0 0.0
        %1636 = vmatprep.subr.mxu0 0.0
        %1637 = vmatpush1.msra.mxu0 0.0
        %1638 = vmatprep.subr.mxu0 0.0
        %1639 = vmatpush1.msra.mxu0 0.0
        %1640 = vmatprep.subr.mxu0 0.0
        %1641 = vmatpush1.msra.mxu0 0.0
        %1642 = vmatprep.subr.mxu0 0.0
        %1643 = vmatpush1.msra.mxu0 0.0
        %1644 = vmatprep.subr.mxu0 0.0
        %1645 = vmatpush1.msra.mxu0 0.0
        %1646 = vmatprep.subr.mxu0 0.0
        %1647 = vmatpush1.msra.mxu0 0.0
        %1648 = vmatprep.subr.mxu0 0.0
        %1649 = vmatpush1.msra.mxu0 0.0
        %1650 = vmatprep.subr.mxu0 0.0
        %1651 = vmatpush1.msra.mxu0 0.0
        %1652 = vmatprep.subr.mxu0 0.0
        %1653 = vmatpush1.msra.mxu0 0.0
        %1654 = vmatprep.subr.mxu0 0.0
        %1655 = vmatpush1.msra.mxu0 0.0
        %1656 = vmatprep.subr.mxu0 0.0
        %1657 = vmatpush1.msra.mxu0 0.0
        %1658 = vmatprep.subr.mxu0 0.0
        %1659 = vmatpush1.msra.mxu0 0.0
        %1660 = vmatprep.subr.mxu0 0.0
        %1661 = vmatpush1.msra.mxu0 0.0
        %1662 = vmatprep.subr.mxu0 0.0
        %1663 = vmatpush1.msra.mxu0 0.0
        %1664 = vmatprep.subr.mxu0 0.0
        %1665 = vmatpush1.msra.mxu0 0.0
        %1666 = vmatprep.subr.mxu0 0.0
        %1667 = vmatpush1.msra.mxu0 0.0
        %1668 = vmatprep.subr.mxu0 0.0
        %1669 = vmatpush1.msra.mxu0 0.0
        %1670 = vmatprep.mubr.f32.mxu0 0.0
        %1671 = vmatmul.mubr.f32.gmra.mrb[0].mxu0 %v1604
        %v1672 = vpop.f32.mrb[0].mxu0
        %v1673 = vadd.f32 0.0, %v1672
        %v1674 = vpop.f32.mrb[0].mxu0
        %1675 = vdwg.mxu0
        %v1676 = vmul.f32 %v1673, %v1599
        %v1677 = vld [vmem:[%s7 + $0x10] sm:$0xff]
        %v1679 = vsel %vm672, %v1676, 0
        %1681 = vmatprep.subr.mxu0 0.0
        %1682 = vmatpush1.msra.mxu0 %v1677
        %1683 = vmatprep.subr.mxu0 0.0
        %1684 = vmatpush1.msra.mxu0 0.0
        %1685 = vmatprep.subr.mxu0 0.0
        %1686 = vmatpush1.msra.mxu0 0.0
        %1687 = vmatprep.subr.mxu0 0.0
        %1688 = vmatpush1.msra.mxu0 0.0
        %1689 = vmatprep.subr.mxu0 0.0
        %1690 = vmatpush1.msra.mxu0 0.0
        %1691 = vmatprep.subr.mxu0 0.0
        %1692 = vmatpush1.msra.mxu0 0.0
        %1693 = vmatprep.subr.mxu0 0.0
        %1694 = vmatpush1.msra.mxu0 0.0
        %1695 = vmatprep.subr.mxu0 0.0
        %1696 = vmatpush1.msra.mxu0 0.0
        %1697 = vmatprep.subr.mxu0 0.0
        %1698 = vmatpush1.msra.mxu0 0.0
        %1699 = vmatprep.subr.mxu0 0.0
        %1700 = vmatpush1.msra.mxu0 0.0
        %1701 = vmatprep.subr.mxu0 0.0
        %1702 = vmatpush1.msra.mxu0 0.0
        %1703 = vmatprep.subr.mxu0 0.0
        %1704 = vmatpush1.msra.mxu0 0.0
        %1705 = vmatprep.subr.mxu0 0.0
        %1706 = vmatpush1.msra.mxu0 0.0
        %1707 = vmatprep.subr.mxu0 0.0
        %1708 = vmatpush1.msra.mxu0 0.0
        %1709 = vmatprep.subr.mxu0 0.0
        %1710 = vmatpush1.msra.mxu0 0.0
        %1711 = vmatprep.subr.mxu0 0.0
        %1712 = vmatpush1.msra.mxu0 0.0
        %1713 = vmatprep.subr.mxu0 0.0
        %1714 = vmatpush1.msra.mxu0 0.0
        %1715 = vmatprep.subr.mxu0 0.0
        %1716 = vmatpush1.msra.mxu0 0.0
        %1717 = vmatprep.subr.mxu0 0.0
        %1718 = vmatpush1.msra.mxu0 0.0
        %1719 = vmatprep.subr.mxu0 0.0
        %1720 = vmatpush1.msra.mxu0 0.0
        %1721 = vmatprep.subr.mxu0 0.0
        %1722 = vmatpush1.msra.mxu0 0.0
        %1723 = vmatprep.subr.mxu0 0.0
        %1724 = vmatpush1.msra.mxu0 0.0
        %1725 = vmatprep.subr.mxu0 0.0
        %1726 = vmatpush1.msra.mxu0 0.0
        %1727 = vmatprep.subr.mxu0 0.0
        %1728 = vmatpush1.msra.mxu0 0.0
        %1729 = vmatprep.subr.mxu0 0.0
        %1730 = vmatpush1.msra.mxu0 0.0
        %1731 = vmatprep.subr.mxu0 0.0
        %1732 = vmatpush1.msra.mxu0 0.0
        %1733 = vmatprep.subr.mxu0 0.0
        %1734 = vmatpush1.msra.mxu0 0.0
        %1735 = vmatprep.subr.mxu0 0.0
        %1736 = vmatpush1.msra.mxu0 0.0
        %1737 = vmatprep.subr.mxu0 0.0
        %1738 = vmatpush1.msra.mxu0 0.0
        %1739 = vmatprep.subr.mxu0 0.0
        %1740 = vmatpush1.msra.mxu0 0.0
        %1741 = vmatprep.subr.mxu0 0.0
        %1742 = vmatpush1.msra.mxu0 0.0
        %1743 = vmatprep.subr.mxu0 0.0
        %1744 = vmatpush1.msra.mxu0 0.0
        %1745 = vmatprep.mubr.f32.mxu0 0.0
        %1746 = vmatmul.mubr.f32.gmra.mrb[0].mxu0 %v1679
        %v1747 = vpop.f32.mrb[0].mxu0
        %v1748 = vadd.f32 0.0, %v1747
        %v1749 = vpop.f32.mrb[0].mxu0
        %1750 = vdwg.mxu0
        %v1751 = vadd.f32 %v1389, %v1748
        %1752 = vrot.lane.b32.xlu0 %v653, 104
        %v1753 = vpop.permute.xlu0 %1752
        %v1754 = vsel %vm672, %v1753, 0
        %1756 = vmatprep.subr.mxu0 0.0
        %1757 = vmatpush1.msra.mxu0 %v657
        %1758 = vmatprep.subr.mxu0 0.0
        %1759 = vmatpush1.msra.mxu0 0.0
        %1760 = vmatprep.subr.mxu0 0.0
        %1761 = vmatpush1.msra.mxu0 0.0
        %1762 = vmatprep.subr.mxu0 0.0
        %1763 = vmatpush1.msra.mxu0 0.0
        %1764 = vmatprep.subr.mxu0 0.0
        %1765 = vmatpush1.msra.mxu0 0.0
        %1766 = vmatprep.subr.mxu0 0.0
        %1767 = vmatpush1.msra.mxu0 0.0
        %1768 = vmatprep.subr.mxu0 0.0
        %1769 = vmatpush1.msra.mxu0 0.0
        %1770 = vmatprep.subr.mxu0 0.0
        %1771 = vmatpush1.msra.mxu0 0.0
        %1772 = vmatprep.subr.mxu0 0.0
        %1773 = vmatpush1.msra.mxu0 0.0
        %1774 = vmatprep.subr.mxu0 0.0
        %1775 = vmatpush1.msra.mxu0 0.0
        %1776 = vmatprep.subr.mxu0 0.0
        %1777 = vmatpush1.msra.mxu0 0.0
        %1778 = vmatprep.subr.mxu0 0.0
        %1779 = vmatpush1.msra.mxu0 0.0
        %1780 = vmatprep.subr.mxu0 0.0
        %1781 = vmatpush1.msra.mxu0 0.0
        %1782 = vmatprep.subr.mxu0 0.0
        %1783 = vmatpush1.msra.mxu0 0.0
        %1784 = vmatprep.subr.mxu0 0.0
        %1785 = vmatpush1.msra.mxu0 0.0
        %1786 = vmatprep.subr.mxu0 0.0
        %1787 = vmatpush1.msra.mxu0 0.0
        %1788 = vmatprep.subr.mxu0 0.0
        %1789 = vmatpush1.msra.mxu0 0.0
        %1790 = vmatprep.subr.mxu0 0.0
        %1791 = vmatpush1.msra.mxu0 0.0
        %1792 = vmatprep.subr.mxu0 0.0
        %1793 = vmatpush1.msra.mxu0 0.0
        %1794 = vmatprep.subr.mxu0 0.0
        %1795 = vmatpush1.msra.mxu0 0.0
        %1796 = vmatprep.subr.mxu0 0.0
        %1797 = vmatpush1.msra.mxu0 0.0
        %1798 = vmatprep.subr.mxu0 0.0
        %1799 = vmatpush1.msra.mxu0 0.0
        %1800 = vmatprep.subr.mxu0 0.0
        %1801 = vmatpush1.msra.mxu0 0.0
        %1802 = vmatprep.subr.mxu0 0.0
        %1803 = vmatpush1.msra.mxu0 0.0
        %1804 = vmatprep.subr.mxu0 0.0
        %1805 = vmatpush1.msra.mxu0 0.0
        %1806 = vmatprep.subr.mxu0 0.0
        %1807 = vmatpush1.msra.mxu0 0.0
        %1808 = vmatprep.subr.mxu0 0.0
        %1809 = vmatpush1.msra.mxu0 0.0
        %1810 = vmatprep.subr.mxu0 0.0
        %1811 = vmatpush1.msra.mxu0 0.0
        %1812 = vmatprep.subr.mxu0 0.0
        %1813 = vmatpush1.msra.mxu0 0.0
        %1814 = vmatprep.subr.mxu0 0.0
        %1815 = vmatpush1.msra.mxu0 0.0
        %1816 = vmatprep.subr.mxu0 0.0
        %1817 = vmatpush1.msra.mxu0 0.0
        %1818 = vmatprep.subr.mxu0 0.0
        %1819 = vmatpush1.msra.mxu0 0.0
        %1820 = vmatprep.mubr.f32.mxu0 0.0
        %1821 = vmatmul.mubr.f32.gmra.mrb[0].mxu0 %v1754
        %v1822 = vpop.f32.mrb[0].mxu0
        %v1823 = vadd.f32 0.0, %v1822
        %v1824 = vpop.f32.mrb[0].mxu0
        %1825 = vdwg.mxu0
        %v1827 = vrot.slane %v1823, 1
        %v1829 = vsel %vm749, %v1827, %v1827
        %1831 = vrot.lane.b32.xlu0 %v1829, 9
        %v1832 = vpop.permute.xlu0 %1831
        %v1834 = vsel %vm755, %v1823, %v1832
        %1836 = vrot.lane.b32.xlu0 %v1834, 127
        %v1837 = vpop.permute.xlu0 %1836
        %1839 = vrot.lane.b32.xlu0 %v1834, 17
        %v1840 = vpop.permute.xlu0 %1839
        %v1842 = vsel %vm764, %v1837, %v1840
        %v1843 = vsel %vm662, %v1842, %v1834
        %1845 = vrot.lane.b32.xlu0 %v1843, 126
        %v1846 = vpop.permute.xlu0 %1845
        %1848 = vrot.lane.b32.xlu0 %v1843, 16
        %v1849 = vpop.permute.xlu0 %1848
        %v1851 = vsel %vm774, %v1846, %v1849
        %v1852 = vsel %vm665, %v1851, %v1843
        %1854 = vrot.lane.b32.xlu0 %v1852, 124
        %v1855 = vpop.permute.xlu0 %1854
        %1857 = vrot.lane.b32.xlu0 %v1852, 14
        %v1858 = vpop.permute.xlu0 %1857
        %v1860 = vsel %vm784, %v1855, %v1858
        %v1861 = vsel %vm668, %v1860, %v1852
        %1863 = vrot.lane.b32.xlu0 %v1861, 120
        %v1864 = vpop.permute.xlu0 %1863
        %1866 = vrot.lane.b32.xlu0 %v1861, 10
        %v1867 = vpop.permute.xlu0 %1866
        %v1869 = vsel %vm794, %v1864, %v1867
        %v1870 = vsel %vm671, %v1869, %v1861
        %1871 = vrot.lane.b32.xlu0 %v647, 104
        %v1872 = vpop.permute.xlu0 %1871
        %1873 = vrot.lane.b32.xlu0 %v559, 104
        %v1874 = vpop.permute.xlu0 %1873
        %v1875 = vsel %vm672, %v1872, 0
        %v1877 = vsel %vm672, %v1874, 0
        %1879 = vmatprep.subr.mxu0 0.0
        %1880 = vmatpush1.xpose.msra.mxu0 %v1877
        %1881 = vmatprep.subr.mxu0 0.0
        %1882 = vmatpush1.xpose.msra.mxu0 0.0
        %1883 = vmatprep.subr.mxu0 0.0
        %1884 = vmatpush1.xpose.msra.mxu0 0.0
        %1885 = vmatprep.subr.mxu0 0.0
        %1886 = vmatpush1.xpose.msra.mxu0 0.0
        %1887 = vmatprep.subr.mxu0 0.0
        %1888 = vmatpush1.xpose.msra.mxu0 0.0
        %1889 = vmatprep.subr.mxu0 0.0
        %1890 = vmatpush1.xpose.msra.mxu0 0.0
        %1891 = vmatprep.subr.mxu0 0.0
        %1892 = vmatpush1.xpose.msra.mxu0 0.0
        %1893 = vmatprep.subr.mxu0 0.0
        %1894 = vmatpush1.xpose.msra.mxu0 0.0
        %1895 = vmatprep.subr.mxu0 0.0
        %1896 = vmatpush1.xpose.msra.mxu0 0.0
        %1897 = vmatprep.subr.mxu0 0.0
        %1898 = vmatpush1.xpose.msra.mxu0 0.0
        %1899 = vmatprep.subr.mxu0 0.0
        %1900 = vmatpush1.xpose.msra.mxu0 0.0
        %1901 = vmatprep.subr.mxu0 0.0
        %1902 = vmatpush1.xpose.msra.mxu0 0.0
        %1903 = vmatprep.subr.mxu0 0.0
        %1904 = vmatpush1.xpose.msra.mxu0 0.0
        %1905 = vmatprep.subr.mxu0 0.0
        %1906 = vmatpush1.xpose.msra.mxu0 0.0
        %1907 = vmatprep.subr.mxu0 0.0
        %1908 = vmatpush1.xpose.msra.mxu0 0.0
        %1909 = vmatprep.subr.mxu0 0.0
        %1910 = vmatpush1.xpose.msra.mxu0 0.0
        %1911 = vmatprep.subr.mxu0 0.0
        %1912 = vmatpush1.xpose.msra.mxu0 0.0
        %1913 = vmatprep.subr.mxu0 0.0
        %1914 = vmatpush1.xpose.msra.mxu0 0.0
        %1915 = vmatprep.subr.mxu0 0.0
        %1916 = vmatpush1.xpose.msra.mxu0 0.0
        %1917 = vmatprep.subr.mxu0 0.0
        %1918 = vmatpush1.xpose.msra.mxu0 0.0
        %1919 = vmatprep.subr.mxu0 0.0
        %1920 = vmatpush1.xpose.msra.mxu0 0.0
        %1921 = vmatprep.subr.mxu0 0.0
        %1922 = vmatpush1.xpose.msra.mxu0 0.0
        %1923 = vmatprep.subr.mxu0 0.0
        %1924 = vmatpush1.xpose.msra.mxu0 0.0
        %1925 = vmatprep.subr.mxu0 0.0
        %1926 = vmatpush1.xpose.msra.mxu0 0.0
        %1927 = vmatprep.subr.mxu0 0.0
        %1928 = vmatpush1.xpose.msra.mxu0 0.0
        %1929 = vmatprep.subr.mxu0 0.0
        %1930 = vmatpush1.xpose.msra.mxu0 0.0
        %1931 = vmatprep.subr.mxu0 0.0
        %1932 = vmatpush1.xpose.msra.mxu0 0.0
        %1933 = vmatprep.subr.mxu0 0.0
        %1934 = vmatpush1.xpose.msra.mxu0 0.0
        %1935 = vmatprep.subr.mxu0 0.0
        %1936 = vmatpush1.xpose.msra.mxu0 0.0
        %1937 = vmatprep.subr.mxu0 0.0
        %1938 = vmatpush1.xpose.msra.mxu0 0.0
        %1939 = vmatprep.subr.mxu0 0.0
        %1940 = vmatpush1.xpose.msra.mxu0 0.0
        %1941 = vmatprep.subr.mxu0 0.0
        %1942 = vmatpush1.xpose.msra.mxu0 0.0
        %1943 = vmatprep.mubr.f32.mxu0 0.0
        %1944 = vmatmul.mubr.f32.gmra.mrb[0].mxu0 %v1875
        %v1945 = vpop.f32.mrb[0].mxu0
        %v1946 = vadd.f32 %v1870, %v1945
        %v1947 = vpop.f32.mrb[0].mxu0
        %1948 = vdwg.mxu0
        %v1949 = vmul.f32 %v1946, 0.17677669
        %v1950 = vsel %vm672, %v1949, -inf
        %1951 = vmax.xlane.f32.xlu0 %v1950
        %v1952 = vpop.xlane.xlu0 %1951
        %v1953 = vsub.f32 %v1949, %v1952
        %v1954 = vmul.f32 %v1953, 1.442695
        %v1955 = vpow.pop %v1954
        %v1956 = vsel %vm672, %v1955, 0.0
        %1957 = vadd.xlane.f32.xlu0 %v1956
        %v1958 = vpop.xlane.xlu0 %1957
        %v1959 = vrcp.pop %v1958
        %1960 = vrot.lane.b32.xlu0 %v639, 104
        %v1961 = vpop.permute.xlu0 %1960
        %v1964 = vsel %vm672, %v1955, 0
        %1966 = vmatprep.subr.mxu0 0.0
        %1967 = vmatpush1.msra.mxu0 %v1961
        %1968 = vmatprep.subr.mxu0 0.0
        %1969 = vmatpush1.msra.mxu0 0.0
        %1970 = vmatprep.subr.mxu0 0.0
        %1971 = vmatpush1.msra.mxu0 0.0
        %1972 = vmatprep.subr.mxu0 0.0
        %1973 = vmatpush1.msra.mxu0 0.0
        %1974 = vmatprep.subr.mxu0 0.0
        %1975 = vmatpush1.msra.mxu0 0.0
        %1976 = vmatprep.subr.mxu0 0.0
        %1977 = vmatpush1.msra.mxu0 0.0
        %1978 = vmatprep.subr.mxu0 0.0
        %1979 = vmatpush1.msra.mxu0 0.0
        %1980 = vmatprep.subr.mxu0 0.0
        %1981 = vmatpush1.msra.mxu0 0.0
        %1982 = vmatprep.subr.mxu0 0.0
        %1983 = vmatpush1.msra.mxu0 0.0
        %1984 = vmatprep.subr.mxu0 0.0
        %1985 = vmatpush1.msra.mxu0 0.0
        %1986 = vmatprep.subr.mxu0 0.0
        %1987 = vmatpush1.msra.mxu0 0.0
        %1988 = vmatprep.subr.mxu0 0.0
        %1989 = vmatpush1.msra.mxu0 0.0
        %1990 = vmatprep.subr.mxu0 0.0
        %1991 = vmatpush1.msra.mxu0 0.0
        %1992 = vmatprep.subr.mxu0 0.0
        %1993 = vmatpush1.msra.mxu0 0.0
        %1994 = vmatprep.subr.mxu0 0.0
        %1995 = vmatpush1.msra.mxu0 0.0
        %1996 = vmatprep.subr.mxu0 0.0
        %1997 = vmatpush1.msra.mxu0 0.0
        %1998 = vmatprep.subr.mxu0 0.0
        %1999 = vmatpush1.msra.mxu0 0.0
        %2000 = vmatprep.subr.mxu0 0.0
        %2001 = vmatpush1.msra.mxu0 0.0
        %2002 = vmatprep.subr.mxu0 0.0
        %2003 = vmatpush1.msra.mxu0 0.0
        %2004 = vmatprep.subr.mxu0 0.0
        %2005 = vmatpush1.msra.mxu0 0.0
        %2006 = vmatprep.subr.mxu0 0.0
        %2007 = vmatpush1.msra.mxu0 0.0
        %2008 = vmatprep.subr.mxu0 0.0
        %2009 = vmatpush1.msra.mxu0 0.0
        %2010 = vmatprep.subr.mxu0 0.0
        %2011 = vmatpush1.msra.mxu0 0.0
        %2012 = vmatprep.subr.mxu0 0.0
        %2013 = vmatpush1.msra.mxu0 0.0
        %2014 = vmatprep.subr.mxu0 0.0
        %2015 = vmatpush1.msra.mxu0 0.0
        %2016 = vmatprep.subr.mxu0 0.0
        %2017 = vmatpush1.msra.mxu0 0.0
        %2018 = vmatprep.subr.mxu0 0.0
        %2019 = vmatpush1.msra.mxu0 0.0
        %2020 = vmatprep.subr.mxu0 0.0
        %2021 = vmatpush1.msra.mxu0 0.0
        %2022 = vmatprep.subr.mxu0 0.0
        %2023 = vmatpush1.msra.mxu0 0.0
        %2024 = vmatprep.subr.mxu0 0.0
        %2025 = vmatpush1.msra.mxu0 0.0
        %2026 = vmatprep.subr.mxu0 0.0
        %2027 = vmatpush1.msra.mxu0 0.0
        %2028 = vmatprep.subr.mxu0 0.0
        %2029 = vmatpush1.msra.mxu0 0.0
        %2030 = vmatprep.mubr.f32.mxu0 0.0
        %2031 = vmatmul.mubr.f32.gmra.mrb[0].mxu0 %v1964
        %v2032 = vpop.f32.mrb[0].mxu0
        %v2033 = vadd.f32 0.0, %v2032
        %v2034 = vpop.f32.mrb[0].mxu0
        %2035 = vdwg.mxu0
        %v2036 = vmul.f32 %v2033, %v1959
        %v2037 = vld [vmem:[%s7 + $0x18] sm:$0xff]
        %v2039 = vsel %vm672, %v2036, 0
        %2041 = vmatprep.subr.mxu0 0.0
        %2042 = vmatpush1.msra.mxu0 %v2037
        %2043 = vmatprep.subr.mxu0 0.0
        %2044 = vmatpush1.msra.mxu0 0.0
        %2045 = vmatprep.subr.mxu0 0.0
        %2046 = vmatpush1.msra.mxu0 0.0
        %2047 = vmatprep.subr.mxu0 0.0
        %2048 = vmatpush1.msra.mxu0 0.0
        %2049 = vmatprep.subr.mxu0 0.0
        %2050 = vmatpush1.msra.mxu0 0.0
        %2051 = vmatprep.subr.mxu0 0.0
        %2052 = vmatpush1.msra.mxu0 0.0
        %2053 = vmatprep.subr.mxu0 0.0
        %2054 = vmatpush1.msra.mxu0 0.0
        %2055 = vmatprep.subr.mxu0 0.0
        %2056 = vmatpush1.msra.mxu0 0.0
        %2057 = vmatprep.subr.mxu0 0.0
        %2058 = vmatpush1.msra.mxu0 0.0
        %2059 = vmatprep.subr.mxu0 0.0
        %2060 = vmatpush1.msra.mxu0 0.0
        %2061 = vmatprep.subr.mxu0 0.0
        %2062 = vmatpush1.msra.mxu0 0.0
        %2063 = vmatprep.subr.mxu0 0.0
        %2064 = vmatpush1.msra.mxu0 0.0
        %2065 = vmatprep.subr.mxu0 0.0
        %2066 = vmatpush1.msra.mxu0 0.0
        %2067 = vmatprep.subr.mxu0 0.0
        %2068 = vmatpush1.msra.mxu0 0.0
        %2069 = vmatprep.subr.mxu0 0.0
        %2070 = vmatpush1.msra.mxu0 0.0
        %2071 = vmatprep.subr.mxu0 0.0
        %2072 = vmatpush1.msra.mxu0 0.0
        %2073 = vmatprep.subr.mxu0 0.0
        %2074 = vmatpush1.msra.mxu0 0.0
        %2075 = vmatprep.subr.mxu0 0.0
        %2076 = vmatpush1.msra.mxu0 0.0
        %2077 = vmatprep.subr.mxu0 0.0
        %2078 = vmatpush1.msra.mxu0 0.0
        %2079 = vmatprep.subr.mxu0 0.0
        %2080 = vmatpush1.msra.mxu0 0.0
        %2081 = vmatprep.subr.mxu0 0.0
        %2082 = vmatpush1.msra.mxu0 0.0
        %2083 = vmatprep.subr.mxu0 0.0
        %2084 = vmatpush1.msra.mxu0 0.0
        %2085 = vmatprep.subr.mxu0 0.0
        %2086 = vmatpush1.msra.mxu0 0.0
        %2087 = vmatprep.subr.mxu0 0.0
        %2088 = vmatpush1.msra.mxu0 0.0
        %2089 = vmatprep.subr.mxu0 0.0
        %2090 = vmatpush1.msra.mxu0 0.0
        %2091 = vmatprep.subr.mxu0 0.0
        %2092 = vmatpush1.msra.mxu0 0.0
        %2093 = vmatprep.subr.mxu0 0.0
        %2094 = vmatpush1.msra.mxu0 0.0
        %2095 = vmatprep.subr.mxu0 0.0
        %2096 = vmatpush1.msra.mxu0 0.0
        %2097 = vmatprep.subr.mxu0 0.0
        %2098 = vmatpush1.msra.mxu0 0.0
        %2099 = vmatprep.subr.mxu0 0.0
        %2100 = vmatpush1.msra.mxu0 0.0
        %2101 = vmatprep.subr.mxu0 0.0
        %2102 = vmatpush1.msra.mxu0 0.0
        %2103 = vmatprep.subr.mxu0 0.0
        %2104 = vmatpush1.msra.mxu0 0.0
        %2105 = vmatprep.mubr.f32.mxu0 0.0
        %2106 = vmatmul.mubr.f32.gmra.mrb[0].mxu0 %v2039
        %v2107 = vpop.f32.mrb[0].mxu0
        %v2108 = vadd.f32 0.0, %v2107
        %v2109 = vpop.f32.mrb[0].mxu0
        %2110 = vdwg.mxu0
        %v2111 = vadd.f32 %v1751, %v2108
        %v2112 = vld [vmem:[%s5 + $0x3] sm:$0x1]
        %v2113 = vlaneseq
        %v2114 = vshrl.u32 %v2113, 7
        %v2115 = vsub.s32 0, %v2114
        %v2116 = vrot.slane %v2112, %v2115
        %v2117 = vadd.f32 %v2111, %v2116
        %2118 = vst.msk [vmem:[%s348] sm:$0xff] %vm356, %v2117
        %s2119 = sand.u32 %s212, 1
        %s2120 = scalar_lea.sflag [#allocation4], %s2119
        %s2121 = sand.u32 %s212, 1
        %s2122 = smul.addr %s2121, 8
        %s2123 = scalar_lea.vmem [#allocation7], %s2122
        // Predicated region
        $region61: #{tpu_custom_call.1} parent=51 // pred_check
          %p2124 = pneg %p222
        $region62: #{tpu_custom_call.1} parent=51 // pred_check_branch
          %2126 = sbr.rel (%p2124) target = $region64
        $region63: #{tpu_custom_call.1} parent=51 // pred_region
          %s2128 = ssub.s32 128, 128
          %2129 = vsyncadd %s2120, %s2128
          %s2130 = smul.addr %s26, 128
          %s2131 = scalar_lea.hbm %s8, %s2130
          %s2133 = sshll.u32 %s2123, 4
          %s2134 = int_to_ptr.vmem [resolvable:$true] %s2133
          %2136 = dma.vmem_to_hbm [thread:$0]  %s2134, 128, %s2131, %s2120
        $region64: #{tpu_custom_call.1} parent=51 // pred_fallthru
          _
      $region52: #{tpu_custom_call.1} parent=5 // pred_fallthru
        _
      %p2137 = scmp.le.s32.totalorder 2, %s21
      // Predicated region
      $region65: #{tpu_custom_call.1} parent=5 // pred_check
        %p2138 = pneg %p2137
      $region66: #{tpu_custom_call.1} parent=5 // pred_check_branch
        %2140 = sbr.rel (%p2138) target = $region68
      $region67: #{tpu_custom_call.1} parent=5 // pred_region
        %s2141 = ssub.s32 %s21, 2
        // Predicated region
        $region69: #{tpu_custom_call.1} parent=67 // pred_check
          %p2142 = pneg %p228
        $region70: #{tpu_custom_call.1} parent=67 // pred_check_branch
          %2144 = sbr.rel (%p2142) target = $region72
        $region71: #{tpu_custom_call.1} parent=67 // pred_region
          %s2145 = sand.u32 %s213, 1
          %s2146 = scalar_lea.sflag [#allocation4], %s2145
          %s2147 = sand.u32 %s213, 1
          %s2148 = smul.addr %s2147, 8
          %s2149 = scalar_lea.vmem [#allocation7], %s2148
          %2150 = dma.done %s2146, 128
        $region72: #{tpu_custom_call.1} parent=67 // pred_fallthru
          _
      $region68: #{tpu_custom_call.1} parent=5 // pred_fallthru
        _
    $region6: #{tpu_custom_call.1} parent=1 // loop_footer
      %s25 = sadd.s32 1, %s21
    $region7: #{tpu_custom_call.1} parent=1 // loop_footer_branch
      %20 = sbr.rel target = $region3
    $region8: #{tpu_custom_call.1} parent=1 // loop_exit
      _
    %2151 = vsyncpa [#allocation3], 1
    %s2152 = scalar_lea.sflag [#allocation3], 1
    %2153 = vsyncpa %s2152, 1
    %2154 = vsyncpa [#allocation6], 1
    %2155 = vsyncpa [#allocation4], 1
    %s2156 = scalar_lea.sflag [#allocation4], 1
    %2157 = vsyncpa %s2156, 1

</llo_original>
